<compile_context>
chip_gen: v7x
topology: tpu7x:2x2x1
jax: 0.10.0
libtpu: 0.0.40
codegen_flags: <defaults>
</compile_context>

<pallas_src>
import functools

import jax
import jax.numpy as jnp
from jax import lax
from jax.experimental import pallas as pl
from jax.experimental.pallas import tpu as pltpu

NEGPOS_RATIO = 3
THRESHHOLD = 0.5
VARIANCE = (0.1, 0.2)


def _match_kernel(priors_ref, gt_ref, pred_loc_ref, conf_ref, loc_sum_ref,
                  *, n_obj, n_priors, bb):
    """Matching + encode + positive-masked smooth-L1 partial sum.

    priors_ref  : (4, P)         priors, lane-dense (P on lanes)
    gt_ref      : (BB, N, 5)     GT boxes per image in this batch block
    pred_loc_ref: (BB, 4, P)     predicted regression, lane-dense
    conf_ref    : (BB, 1, P)     out: matched class (+1) or 0
    loc_sum_ref : (BB, 1, 1)     out: per-image smooth-L1 sum over positives
    """
    pr = priors_ref[...]                                  # (4, P)
    cx, cy = pr[0:1, :], pr[1:2, :]                       # (1, P)
    w, h = pr[2:3, :], pr[3:4, :]
    px1 = cx - 0.5 * w
    py1 = cy - 0.5 * h
    px2 = cx + 0.5 * w
    py2 = cy + 0.5 * h
    area_p = w * h                                        # (1, P)

    # reciprocals go to the (otherwise idle) EUP slot
    inv_w = pl.reciprocal(w, approx=True)
    inv_h = pl.reciprocal(h, approx=True)
    inv_wv = pl.reciprocal(w * VARIANCE[0], approx=True)
    inv_hv = pl.reciprocal(h * VARIANCE[0], approx=True)
    inv_var1 = 1.0 / VARIANCE[1]                          # exact (== 5.0)

    j_iota = lax.broadcasted_iota(jnp.int32, (n_obj, n_priors), 0)  # GT id (sublanes)
    p_iota = lax.broadcasted_iota(jnp.int32, (n_obj, n_priors), 1)  # prior id (lanes)

    for i in range(bb):                                   # BB is small & static -> unrolled
        gt = gt_ref[i]                                    # (N, 5)
        gx1, gy1 = gt[:, 0:1], gt[:, 1:2]                 # (N, 1)
        gx2, gy2 = gt[:, 2:3], gt[:, 3:4]
        glab = gt[:, 4:5]

        # ---- IOU matrix, lane-dense: (N, P) ----
        area_g = (gx2 - gx1) * (gy2 - gy1)                # (N, 1)
        ixmin = jnp.maximum(px1, gx1)
        iymin = jnp.maximum(py1, gy1)
        ixmax = jnp.minimum(px2, gx2)
        iymax = jnp.minimum(py2, gy2)
        iw = jnp.maximum(ixmax - ixmin, 0.0)
        ih = jnp.maximum(iymax - iymin, 0.0)
        inter = iw * ih
        iou = inter * pl.reciprocal(area_p + area_g - inter, approx=True)   # (N, P)

        # best GT per prior (reduce over sublanes) / best prior per GT (reduce over lanes)
        best_gt_ovl = jnp.max(iou, axis=0, keepdims=True)                   # (1, P)
        best_gt_idx = jnp.min(jnp.where(iou == best_gt_ovl, j_iota, n_obj),
                              axis=0, keepdims=True)                        # (1, P)
        best_pr_ovl = jnp.max(iou, axis=1, keepdims=True)                   # (N, 1)
        best_pr_idx = jnp.min(jnp.where(iou == best_pr_ovl, p_iota, n_priors),
                              axis=1, keepdims=True)                        # (N, 1)

        # index_fill(best_priory_idx, 2) + "best prior of GT j gets GT j" override loop
        matches = best_pr_idx == p_iota                                     # (N, P)
        forced = jnp.max(matches.astype(jnp.int32), axis=0, keepdims=True)  # (1, P)
        best_gt_ovl = jnp.where(forced > 0, 2.0, best_gt_ovl)
        override = jnp.max(jnp.where(matches, j_iota, -1), axis=0, keepdims=True)
        best_gt_idx = jnp.where(override >= 0, override, best_gt_idx)       # (1, P)

        # gather GT rows per prior via one-hot masked sublane reductions
        sel = best_gt_idx == j_iota                                         # (N, P)

        def gather_col(col):                                                # (N,1) -> (1,P)
            return jnp.sum(jnp.where(sel, col, 0.0), axis=0, keepdims=True)

        mx1, my1 = gather_col(gx1), gather_col(gy1)
        mx2, my2 = gather_col(gx2), gather_col(gy2)
        label = gather_col(glab)

        conf = jnp.where(best_gt_ovl < THRESHHOLD, 0.0, label + 1.0)        # (1, P)

        # encode(matched point-form boxes, priors center-form)
        e_cx = ((mx1 + mx2) * 0.5 - cx) * inv_wv
        e_cy = ((my1 + my2) * 0.5 - cy) * inv_hv
        e_w = jnp.log((mx2 - mx1) * inv_w) * inv_var1
        e_h = jnp.log((my2 - my1) * inv_h) * inv_var1

        # fused positive-masked smooth-L1 (loc_t never leaves VMEM)
        pli = pred_loc_ref[i]                                               # (4, P)

        def sl1(pred_row, enc_row):
            d = jnp.abs(pred_row - enc_row)
            return jnp.where(d < 1.0, 0.5 * d * d, d - 0.5)

        s = (sl1(pli[0:1, :], e_cx) + sl1(pli[1:2, :], e_cy)
             + sl1(pli[2:3, :], e_w) + sl1(pli[3:4, :], e_h))               # (1, P)
        masked = jnp.where(conf > 0.0, s, 0.0)

        conf_ref[i] = conf                                                  # lane-dense store
        loc_sum_ref[i] = jnp.sum(masked, keepdims=True)                     # (1, 1)


def _conf_loss_kernel(conf_ref, tgt_ref, out_ref):
    """Per-anchor cross-entropy, anchors on the lane axis.

    conf_ref: (C, TB), tgt_ref: (1, TB) int32, out_ref: (1, TB).
    Per-anchor max is used for the LSE; it cancels exactly in lse - gathered, so this
    matches the reference's global-max log_sum_exp.
    """
    x = conf_ref[...]                                                       # (C, TB)
    t = tgt_ref[...]                                                        # (1, TB)
    m = jnp.max(x, axis=0, keepdims=True)                                   # (1, TB)
    lse = jnp.log(jnp.sum(jnp.exp(x - m), axis=0, keepdims=True)) + m       # (1, TB)
    cls_iota = lax.broadcasted_iota(jnp.int32, x.shape, 0)
    gathered = jnp.sum(jnp.where(cls_iota == t, x, 0.0), axis=0, keepdims=True)
    out_ref[...] = lse - gathered


def _conf_sum_kernel(lc_ref, sel_ref, out_ref):
    """sel-masked confidence-loss sum.  lc_ref/sel_ref: (B, P) lane-dense."""
    out_ref[0, 0] = jnp.sum(lc_ref[...] * sel_ref[...])


def _pick_batch_block(b, max_bb=8):
    bb = min(b, max_bb)
    while b % bb:
        bb -= 1
    return bb


def _pick_lane_tile(total):
    for t in (2048, 1024, 512, 256, 128):
        if total % t == 0:
            return t
    return total


def multibox_loss(pred_conf, pred_loc, priory_boxes, truth):
    """Forward of MultiboxLoss. Returns (loss_loc, loss_conf)."""
    f32 = jnp.float32
    B, P, C = pred_conf.shape
    N = truth.shape[1]
    BP = B * P

    # ---- lane-dense layout plumbing (wrapper-side, free) ----
    priors_t = jnp.transpose(priory_boxes.astype(f32), (1, 0))              # (4, P)
    pred_loc_t = jnp.transpose(pred_loc.astype(f32), (0, 2, 1))             # (B, 4, P)
    truth_f = truth.astype(f32)                                             # (B, N, 5)

    # ---- kernel 1: matching + encode + fused positive smooth-L1 partial sums ----
    BB = _pick_batch_block(B)
    conf_t3, loc_part = pl.pallas_call(
        functools.partial(_match_kernel, n_obj=N, n_priors=P, bb=BB),
        grid=(B // BB,),
        in_specs=[
            pl.BlockSpec((4, P), lambda b: (0, 0)),
            pl.BlockSpec((BB, N, 5), lambda b: (b, 0, 0)),
            pl.BlockSpec((BB, 4, P), lambda b: (b, 0, 0)),
        ],
        out_specs=[
            pl.BlockSpec((BB, 1, P), lambda b: (b, 0, 0)),
            pl.BlockSpec((BB, 1, 1), lambda b: (b, 0, 0)),
        ],
        out_shape=[
            jax.ShapeDtypeStruct((B, 1, P), f32),
            jax.ShapeDtypeStruct((B, 1, 1), f32),
        ],
        compiler_params=pltpu.CompilerParams(dimension_semantics=("parallel",)),
    )(priors_t, truth_f, pred_loc_t)
    conf_t = conf_t3[:, 0, :]                                               # (B, P)

    # ---- kernel 2: per-anchor confidence loss, gridded over B*P lane tiles ----
    conf_cn = jnp.transpose(pred_conf.astype(f32).reshape(BP, C), (1, 0))   # (C, BP)
    tgt = conf_t.reshape(1, BP).astype(jnp.int32)                           # (1, BP)
    TB = _pick_lane_tile(BP)
    lc = pl.pallas_call(
        _conf_loss_kernel,
        grid=(BP // TB,),
        in_specs=[
            pl.BlockSpec((C, TB), lambda i: (0, i)),
            pl.BlockSpec((1, TB), lambda i: (0, i)),
        ],
        out_specs=pl.BlockSpec((1, TB), lambda i: (0, i)),
        out_shape=jax.ShapeDtypeStruct((1, BP), f32),
        compiler_params=pltpu.CompilerParams(dimension_semantics=("parallel",)),
    )(conf_cn, tgt)
    loss_conf = lc.reshape(B, P)

    # ---- hard negative mining (JAX glue; reproduces the reference literally) ----
    pos = conf_t > 0
    num_pos = jnp.sum(pos.astype(jnp.int32), axis=1, keepdims=True)         # (B, 1)
    # Reference bug reproduced verbatim: clamp(max=num_pos.size(1)-1) == 0, so num_neg == 0
    # and no negatives are ever mined.  (The usual SSD code clamps at P-1.)
    num_neg = jnp.minimum(NEGPOS_RATIO * num_pos, num_pos.shape[1] - 1)
    lc_zeroed = jnp.where(pos, 0.0, loss_conf)
    # Reference: `_, idx_rank = loss_conf.sort(1)` yields sorted *indices*, not ranks;
    # reproduced verbatim (moot because num_neg == 0).
    # TODO(synk): no Pallas sort primitive; argsort stays in plain JAX.
    idx_rank = jnp.argsort(lc_zeroed, axis=1)
    neg = idx_rank < num_neg
    sel = jnp.logical_or(pos, neg).astype(f32)                              # (B, P)

    # ---- kernel 3: sel-masked confidence-loss sum ----
    conf_sum = pl.pallas_call(
        _conf_sum_kernel,
        out_shape=jax.ShapeDtypeStruct((1, 1), f32),
        out_specs=pl.BlockSpec(memory_space=pltpu.MemorySpace.SMEM),
    )(loss_conf, sel)

    n_total = jnp.sum(num_pos).astype(f32)
    # Guard against divide-by-zero when there are no positives (reference would NaN here).
    n_safe = jnp.maximum(n_total, 1.0)
    loss_loc = jnp.sum(loc_part) / n_safe
    loss_c = conf_sum[0, 0] / n_safe
    return loss_loc, loss_c


if __name__ == "__main__":
    key = jax.random.PRNGKey(0)
    B, P, C, N = 2, 64, 5, 3  # batch, num priors, num classes (incl. background), GT per image
    k1, k2, k3, k4, k5, k6 = jax.random.split(key, 6)

    pred_conf = jax.random.normal(k1, (B, P, C), dtype=jnp.float32)
    pred_loc = 0.1 * jax.random.normal(k2, (B, P, 4), dtype=jnp.float32)

    # priors in (cx, cy, w, h) form
    ctr = jax.random.uniform(k3, (P, 2), minval=0.15, maxval=0.85)
    wh = jax.random.uniform(k4, (P, 2), minval=0.10, maxval=0.30)
    priory_boxes = jnp.concatenate([ctr, wh], axis=1).astype(jnp.float32)

    # ground truth: (x1, y1, x2, y2, label) per object
    xy1 = jax.random.uniform(k5, (B, N, 2), minval=0.05, maxval=0.55)
    gwh = jax.random.uniform(k6, (B, N, 2), minval=0.15, maxval=0.40)
    labels = jax.random.randint(jax.random.PRNGKey(7), (B, N, 1), 0, C - 1).astype(jnp.float32)
    truth = jnp.concatenate([xy1, xy1 + gwh, labels], axis=2).astype(jnp.float32)

    loss_loc, loss_c = jax.jit(multibox_loss)(pred_conf, pred_loc, priory_boxes, truth)
    jax.block_until_ready((loss_loc, loss_c))
    print("KERNEL_OK")
</pallas_src>

<mosaic_0001>
module attributes {stable_mosaic.version = 11 : i64} {
  func.func @_match_kernel(%arg0: i32, %arg1: memref<4x64xf32, #tpu.memory_space<vmem>>, %arg2: memref<2x3x5xf32, #tpu.memory_space<vmem>>, %arg3: memref<2x4x64xf32, #tpu.memory_space<vmem>>, %arg4: memref<2x1x64xf32, #tpu.memory_space<vmem>>, %arg5: memref<2x1x1xf32, #tpu.memory_space<vmem>>) attributes {dimension_semantics = [#tpu.dimension_semantics<parallel>], iteration_bounds = array<i64: 1>, scalar_prefetch = 0 : i64, scratch_operands = 0 : i64, tpu.core_type = #tpu.core_type<tc>, window_params = [{pipeline_mode = #tpu.pipeline_mode<synchronous>, transform_indices = @transform_0, window_bounds = array<i64: 4, 64>}, {transform_indices = @transform_1, window_bounds = array<i64: 2, 3, 5>}, {transform_indices = @transform_2, window_bounds = array<i64: 2, 4, 64>}, {transform_indices = @transform_3, window_bounds = array<i64: 2, 1, 64>}, {transform_indices = @transform_4, window_bounds = array<i64: 2, 1, 1>}]} {
    %c0 = arith.constant 0 : index
    %c0_0 = arith.constant 0 : index
    %0 = vector.load %arg1[%c0, %c0_0] : memref<4x64xf32, #tpu.memory_space<vmem>>, vector<4x64xf32>
    %1 = vector.extract_strided_slice %0 {offsets = [0, 0], sizes = [1, 64], strides = [1, 1]} : vector<4x64xf32> to vector<1x64xf32>
    %2 = vector.extract_strided_slice %0 {offsets = [1, 0], sizes = [1, 64], strides = [1, 1]} : vector<4x64xf32> to vector<1x64xf32>
    %3 = vector.extract_strided_slice %0 {offsets = [2, 0], sizes = [1, 64], strides = [1, 1]} : vector<4x64xf32> to vector<1x64xf32>
    %4 = vector.extract_strided_slice %0 {offsets = [3, 0], sizes = [1, 64], strides = [1, 1]} : vector<4x64xf32> to vector<1x64xf32>
    %cst = arith.constant 5.000000e-01 : f32
    %5 = vector.broadcast %cst : f32 to vector<1x64xf32>
    %6 = arith.mulf %5, %3 : vector<1x64xf32>
    %7 = arith.subf %1, %6 : vector<1x64xf32>
    %cst_1 = arith.constant 5.000000e-01 : f32
    %8 = vector.broadcast %cst_1 : f32 to vector<1x64xf32>
    %9 = arith.mulf %8, %4 : vector<1x64xf32>
    %10 = arith.subf %2, %9 : vector<1x64xf32>
    %cst_2 = arith.constant 5.000000e-01 : f32
    %11 = vector.broadcast %cst_2 : f32 to vector<1x64xf32>
    %12 = arith.mulf %11, %3 : vector<1x64xf32>
    %13 = arith.addf %1, %12 : vector<1x64xf32>
    %cst_3 = arith.constant 5.000000e-01 : f32
    %14 = vector.broadcast %cst_3 : f32 to vector<1x64xf32>
    %15 = arith.mulf %14, %4 : vector<1x64xf32>
    %16 = arith.addf %2, %15 : vector<1x64xf32>
    %17 = arith.mulf %3, %4 : vector<1x64xf32>
    %18 = tpu.reciprocal %3 {approx = true} : vector<1x64xf32> -> vector<1x64xf32>
    %19 = tpu.reciprocal %4 {approx = true} : vector<1x64xf32> -> vector<1x64xf32>
    %cst_4 = arith.constant 1.000000e-01 : f32
    %20 = vector.broadcast %cst_4 : f32 to vector<1x64xf32>
    %21 = arith.mulf %3, %20 : vector<1x64xf32>
    %22 = tpu.reciprocal %21 {approx = true} : vector<1x64xf32> -> vector<1x64xf32>
    %cst_5 = arith.constant 1.000000e-01 : f32
    %23 = vector.broadcast %cst_5 : f32 to vector<1x64xf32>
    %24 = arith.mulf %4, %23 : vector<1x64xf32>
    %25 = tpu.reciprocal %24 {approx = true} : vector<1x64xf32> -> vector<1x64xf32>
    %26 = tpu.iota {dimensions = array<i32: 0>} : vector<3x64xi32>
    %27 = tpu.iota {dimensions = array<i32: 1>} : vector<3x64xi32>
    %c0_6 = arith.constant 0 : index
    %c0_7 = arith.constant 0 : index
    %c0_8 = arith.constant 0 : index
    %28 = vector.load %arg2[%c0_6, %c0_7, %c0_8] : memref<2x3x5xf32, #tpu.memory_space<vmem>>, vector<1x3x5xf32>
    %29 = vector.shape_cast %28 : vector<1x3x5xf32> to vector<3x5xf32>
    %30 = vector.extract_strided_slice %29 {offsets = [0, 0], sizes = [3, 1], strides = [1, 1]} : vector<3x5xf32> to vector<3x1xf32>
    %31 = vector.extract_strided_slice %29 {offsets = [0, 1], sizes = [3, 1], strides = [1, 1]} : vector<3x5xf32> to vector<3x1xf32>
    %32 = vector.extract_strided_slice %29 {offsets = [0, 2], sizes = [3, 1], strides = [1, 1]} : vector<3x5xf32> to vector<3x1xf32>
    %33 = vector.extract_strided_slice %29 {offsets = [0, 3], sizes = [3, 1], strides = [1, 1]} : vector<3x5xf32> to vector<3x1xf32>
    %34 = vector.extract_strided_slice %29 {offsets = [0, 4], sizes = [3, 1], strides = [1, 1]} : vector<3x5xf32> to vector<3x1xf32>
    %35 = arith.subf %32, %30 : vector<3x1xf32>
    %36 = arith.subf %33, %31 : vector<3x1xf32>
    %37 = arith.mulf %35, %36 : vector<3x1xf32>
    %38 = vector.broadcast %7 : vector<1x64xf32> to vector<3x64xf32>
    %39 = vector.broadcast %30 : vector<3x1xf32> to vector<3x64xf32>
    %40 = arith.maximumf %38, %39 : vector<3x64xf32>
    %41 = vector.broadcast %10 : vector<1x64xf32> to vector<3x64xf32>
    %42 = vector.broadcast %31 : vector<3x1xf32> to vector<3x64xf32>
    %43 = arith.maximumf %41, %42 : vector<3x64xf32>
    %44 = vector.broadcast %13 : vector<1x64xf32> to vector<3x64xf32>
    %45 = vector.broadcast %32 : vector<3x1xf32> to vector<3x64xf32>
    %46 = arith.minimumf %44, %45 : vector<3x64xf32>
    %47 = vector.broadcast %16 : vector<1x64xf32> to vector<3x64xf32>
    %48 = vector.broadcast %33 : vector<3x1xf32> to vector<3x64xf32>
    %49 = arith.minimumf %47, %48 : vector<3x64xf32>
    %50 = arith.subf %46, %40 : vector<3x64xf32>
    %cst_9 = arith.constant 0.000000e+00 : f32
    %51 = vector.broadcast %cst_9 : f32 to vector<3x64xf32>
    %52 = arith.maximumf %50, %51 : vector<3x64xf32>
    %53 = arith.subf %49, %43 : vector<3x64xf32>
    %cst_10 = arith.constant 0.000000e+00 : f32
    %54 = vector.broadcast %cst_10 : f32 to vector<3x64xf32>
    %55 = arith.maximumf %53, %54 : vector<3x64xf32>
    %56 = arith.mulf %52, %55 : vector<3x64xf32>
    %57 = vector.broadcast %17 : vector<1x64xf32> to vector<3x64xf32>
    %58 = vector.broadcast %37 : vector<3x1xf32> to vector<3x64xf32>
    %59 = arith.addf %57, %58 : vector<3x64xf32>
    %60 = arith.subf %59, %56 : vector<3x64xf32>
    %61 = tpu.reciprocal %60 {approx = true} : vector<3x64xf32> -> vector<3x64xf32>
    %62 = arith.mulf %56, %61 : vector<3x64xf32>
    %cst_11 = arith.constant dense<0xFF800000> : vector<64xf32>
    %63 = vector.multi_reduction <maximumf>, %62, %cst_11 [0] : vector<3x64xf32> to vector<64xf32>
    %64 = vector.shape_cast %63 : vector<64xf32> to vector<1x64xf32>
    %65 = vector.broadcast %64 : vector<1x64xf32> to vector<3x64xf32>
    %66 = arith.cmpf oeq, %62, %65 : vector<3x64xf32>
    %c3_i32 = arith.constant 3 : i32
    %67 = vector.broadcast %c3_i32 : i32 to vector<3x64xi32>
    %68 = arith.select %66, %26, %67 : vector<3x64xi1>, vector<3x64xi32>
    %cst_12 = arith.constant dense<2147483647> : vector<64xi32>
    %69 = vector.multi_reduction <minsi>, %68, %cst_12 [0] : vector<3x64xi32> to vector<64xi32>
    %70 = vector.shape_cast %69 : vector<64xi32> to vector<1x64xi32>
    %cst_13 = arith.constant dense<0xFF800000> : vector<3xf32>
    %71 = vector.multi_reduction <maximumf>, %62, %cst_13 [1] : vector<3x64xf32> to vector<3xf32>
    %72 = vector.shape_cast %71 : vector<3xf32> to vector<3x1xf32>
    %73 = vector.broadcast %72 : vector<3x1xf32> to vector<3x64xf32>
    %74 = arith.cmpf oeq, %62, %73 : vector<3x64xf32>
    %c64_i32 = arith.constant 64 : i32
    %75 = vector.broadcast %c64_i32 : i32 to vector<3x64xi32>
    %76 = arith.select %74, %27, %75 : vector<3x64xi1>, vector<3x64xi32>
    %cst_14 = arith.constant dense<2147483647> : vector<3xi32>
    %77 = vector.multi_reduction <minsi>, %76, %cst_14 [1] : vector<3x64xi32> to vector<3xi32>
    %78 = vector.shape_cast %77 : vector<3xi32> to vector<3x1xi32>
    %79 = vector.broadcast %78 : vector<3x1xi32> to vector<3x64xi32>
    %80 = arith.cmpi eq, %79, %27 : vector<3x64xi32>
    %81 = arith.extui %80 : vector<3x64xi1> to vector<3x64xi32>
    %cst_15 = arith.constant dense<-2147483648> : vector<64xi32>
    %82 = vector.multi_reduction <maxsi>, %81, %cst_15 [0] : vector<3x64xi32> to vector<64xi32>
    %83 = vector.shape_cast %82 : vector<64xi32> to vector<1x64xi32>
    %c0_i32 = arith.constant 0 : i32
    %84 = vector.broadcast %c0_i32 : i32 to vector<1x64xi32>
    %85 = arith.cmpi sgt, %83, %84 : vector<1x64xi32>
    %cst_16 = arith.constant 2.000000e+00 : f32
    %86 = vector.broadcast %cst_16 : f32 to vector<1x64xf32>
    %87 = arith.select %85, %86, %64 : vector<1x64xi1>, vector<1x64xf32>
    %c-1_i32 = arith.constant -1 : i32
    %88 = vector.broadcast %c-1_i32 : i32 to vector<3x64xi32>
    %89 = arith.select %80, %26, %88 : vector<3x64xi1>, vector<3x64xi32>
    %cst_17 = arith.constant dense<-2147483648> : vector<64xi32>
    %90 = vector.multi_reduction <maxsi>, %89, %cst_17 [0] : vector<3x64xi32> to vector<64xi32>
    %91 = vector.shape_cast %90 : vector<64xi32> to vector<1x64xi32>
    %c0_i32_18 = arith.constant 0 : i32
    %92 = vector.broadcast %c0_i32_18 : i32 to vector<1x64xi32>
    %93 = arith.cmpi sge, %91, %92 : vector<1x64xi32>
    %94 = arith.select %93, %91, %70 : vector<1x64xi1>, vector<1x64xi32>
    %95 = vector.broadcast %94 : vector<1x64xi32> to vector<3x64xi32>
    %96 = arith.cmpi eq, %95, %26 : vector<3x64xi32>
    %cst_19 = arith.constant 0.000000e+00 : f32
    %97 = vector.shape_cast %30 : vector<3x1xf32> to vector<3x1xf32>
    %98 = vector.broadcast %97 : vector<3x1xf32> to vector<3x64xf32>
    %99 = vector.broadcast %cst_19 : f32 to vector<3x64xf32>
    %100 = arith.select %96, %98, %99 : vector<3x64xi1>, vector<3x64xf32>
    %cst_20 = arith.constant dense<0.000000e+00> : vector<64xf32>
    %101 = vector.multi_reduction <add>, %100, %cst_20 [0] : vector<3x64xf32> to vector<64xf32>
    %102 = vector.shape_cast %101 : vector<64xf32> to vector<1x64xf32>
    %cst_21 = arith.constant 0.000000e+00 : f32
    %103 = vector.shape_cast %31 : vector<3x1xf32> to vector<3x1xf32>
    %104 = vector.broadcast %103 : vector<3x1xf32> to vector<3x64xf32>
    %105 = vector.broadcast %cst_21 : f32 to vector<3x64xf32>
    %106 = arith.select %96, %104, %105 : vector<3x64xi1>, vector<3x64xf32>
    %cst_22 = arith.constant dense<0.000000e+00> : vector<64xf32>
    %107 = vector.multi_reduction <add>, %106, %cst_22 [0] : vector<3x64xf32> to vector<64xf32>
    %108 = vector.shape_cast %107 : vector<64xf32> to vector<1x64xf32>
    %cst_23 = arith.constant 0.000000e+00 : f32
    %109 = vector.shape_cast %32 : vector<3x1xf32> to vector<3x1xf32>
    %110 = vector.broadcast %109 : vector<3x1xf32> to vector<3x64xf32>
    %111 = vector.broadcast %cst_23 : f32 to vector<3x64xf32>
    %112 = arith.select %96, %110, %111 : vector<3x64xi1>, vector<3x64xf32>
    %cst_24 = arith.constant dense<0.000000e+00> : vector<64xf32>
    %113 = vector.multi_reduction <add>, %112, %cst_24 [0] : vector<3x64xf32> to vector<64xf32>
    %114 = vector.shape_cast %113 : vector<64xf32> to vector<1x64xf32>
    %cst_25 = arith.constant 0.000000e+00 : f32
    %115 = vector.shape_cast %33 : vector<3x1xf32> to vector<3x1xf32>
    %116 = vector.broadcast %115 : vector<3x1xf32> to vector<3x64xf32>
    %117 = vector.broadcast %cst_25 : f32 to vector<3x64xf32>
    %118 = arith.select %96, %116, %117 : vector<3x64xi1>, vector<3x64xf32>
    %cst_26 = arith.constant dense<0.000000e+00> : vector<64xf32>
    %119 = vector.multi_reduction <add>, %118, %cst_26 [0] : vector<3x64xf32> to vector<64xf32>
    %120 = vector.shape_cast %119 : vector<64xf32> to vector<1x64xf32>
    %cst_27 = arith.constant 0.000000e+00 : f32
    %121 = vector.shape_cast %34 : vector<3x1xf32> to vector<3x1xf32>
    %122 = vector.broadcast %121 : vector<3x1xf32> to vector<3x64xf32>
    %123 = vector.broadcast %cst_27 : f32 to vector<3x64xf32>
    %124 = arith.select %96, %122, %123 : vector<3x64xi1>, vector<3x64xf32>
    %cst_28 = arith.constant dense<0.000000e+00> : vector<64xf32>
    %125 = vector.multi_reduction <add>, %124, %cst_28 [0] : vector<3x64xf32> to vector<64xf32>
    %126 = vector.shape_cast %125 : vector<64xf32> to vector<1x64xf32>
    %cst_29 = arith.constant 5.000000e-01 : f32
    %127 = vector.broadcast %cst_29 : f32 to vector<1x64xf32>
    %128 = arith.cmpf olt, %87, %127 : vector<1x64xf32>
    %cst_30 = arith.constant 1.000000e+00 : f32
    %129 = vector.broadcast %cst_30 : f32 to vector<1x64xf32>
    %130 = arith.addf %126, %129 : vector<1x64xf32>
    %cst_31 = arith.constant 0.000000e+00 : f32
    %131 = vector.broadcast %cst_31 : f32 to vector<1x64xf32>
    %132 = arith.select %128, %131, %130 : vector<1x64xi1>, vector<1x64xf32>
    %133 = arith.addf %102, %114 : vector<1x64xf32>
    %cst_32 = arith.constant 5.000000e-01 : f32
    %134 = vector.broadcast %cst_32 : f32 to vector<1x64xf32>
    %135 = arith.mulf %133, %134 : vector<1x64xf32>
    %136 = arith.subf %135, %1 : vector<1x64xf32>
    %137 = arith.mulf %136, %22 : vector<1x64xf32>
    %138 = arith.addf %108, %120 : vector<1x64xf32>
    %cst_33 = arith.constant 5.000000e-01 : f32
    %139 = vector.broadcast %cst_33 : f32 to vector<1x64xf32>
    %140 = arith.mulf %138, %139 : vector<1x64xf32>
    %141 = arith.subf %140, %2 : vector<1x64xf32>
    %142 = arith.mulf %141, %25 : vector<1x64xf32>
    %143 = arith.subf %114, %102 : vector<1x64xf32>
    %144 = arith.mulf %143, %18 : vector<1x64xf32>
    %145 = math.log %144 : vector<1x64xf32>
    %cst_34 = arith.constant 5.000000e+00 : f32
    %146 = vector.broadcast %cst_34 : f32 to vector<1x64xf32>
    %147 = arith.mulf %145, %146 : vector<1x64xf32>
    %148 = arith.subf %120, %108 : vector<1x64xf32>
    %149 = arith.mulf %148, %19 : vector<1x64xf32>
    %150 = math.log %149 : vector<1x64xf32>
    %cst_35 = arith.constant 5.000000e+00 : f32
    %151 = vector.broadcast %cst_35 : f32 to vector<1x64xf32>
    %152 = arith.mulf %150, %151 : vector<1x64xf32>
    %c0_36 = arith.constant 0 : index
    %c0_37 = arith.constant 0 : index
    %c0_38 = arith.constant 0 : index
    %153 = vector.load %arg3[%c0_36, %c0_37, %c0_38] : memref<2x4x64xf32, #tpu.memory_space<vmem>>, vector<1x4x64xf32>
    %154 = vector.shape_cast %153 : vector<1x4x64xf32> to vector<4x64xf32>
    %155 = vector.extract_strided_slice %154 {offsets = [0, 0], sizes = [1, 64], strides = [1, 1]} : vector<4x64xf32> to vector<1x64xf32>
    %156 = arith.subf %155, %137 : vector<1x64xf32>
    %157 = math.absf %156 : vector<1x64xf32>
    %cst_39 = arith.constant 1.000000e+00 : f32
    %158 = vector.broadcast %cst_39 : f32 to vector<1x64xf32>
    %159 = arith.cmpf olt, %157, %158 : vector<1x64xf32>
    %cst_40 = arith.constant 5.000000e-01 : f32
    %160 = vector.broadcast %cst_40 : f32 to vector<1x64xf32>
    %161 = arith.mulf %160, %157 : vector<1x64xf32>
    %162 = arith.mulf %161, %157 : vector<1x64xf32>
    %cst_41 = arith.constant 5.000000e-01 : f32
    %163 = vector.broadcast %cst_41 : f32 to vector<1x64xf32>
    %164 = arith.subf %157, %163 : vector<1x64xf32>
    %165 = arith.select %159, %162, %164 : vector<1x64xi1>, vector<1x64xf32>
    %166 = vector.extract_strided_slice %154 {offsets = [1, 0], sizes = [1, 64], strides = [1, 1]} : vector<4x64xf32> to vector<1x64xf32>
    %167 = arith.subf %166, %142 : vector<1x64xf32>
    %168 = math.absf %167 : vector<1x64xf32>
    %cst_42 = arith.constant 1.000000e+00 : f32
    %169 = vector.broadcast %cst_42 : f32 to vector<1x64xf32>
    %170 = arith.cmpf olt, %168, %169 : vector<1x64xf32>
    %cst_43 = arith.constant 5.000000e-01 : f32
    %171 = vector.broadcast %cst_43 : f32 to vector<1x64xf32>
    %172 = arith.mulf %171, %168 : vector<1x64xf32>
    %173 = arith.mulf %172, %168 : vector<1x64xf32>
    %cst_44 = arith.constant 5.000000e-01 : f32
    %174 = vector.broadcast %cst_44 : f32 to vector<1x64xf32>
    %175 = arith.subf %168, %174 : vector<1x64xf32>
    %176 = arith.select %170, %173, %175 : vector<1x64xi1>, vector<1x64xf32>
    %177 = arith.addf %165, %176 : vector<1x64xf32>
    %178 = vector.extract_strided_slice %154 {offsets = [2, 0], sizes = [1, 64], strides = [1, 1]} : vector<4x64xf32> to vector<1x64xf32>
    %179 = arith.subf %178, %147 : vector<1x64xf32>
    %180 = math.absf %179 : vector<1x64xf32>
    %cst_45 = arith.constant 1.000000e+00 : f32
    %181 = vector.broadcast %cst_45 : f32 to vector<1x64xf32>
    %182 = arith.cmpf olt, %180, %181 : vector<1x64xf32>
    %cst_46 = arith.constant 5.000000e-01 : f32
    %183 = vector.broadcast %cst_46 : f32 to vector<1x64xf32>
    %184 = arith.mulf %183, %180 : vector<1x64xf32>
    %185 = arith.mulf %184, %180 : vector<1x64xf32>
    %cst_47 = arith.constant 5.000000e-01 : f32
    %186 = vector.broadcast %cst_47 : f32 to vector<1x64xf32>
    %187 = arith.subf %180, %186 : vector<1x64xf32>
    %188 = arith.select %182, %185, %187 : vector<1x64xi1>, vector<1x64xf32>
    %189 = arith.addf %177, %188 : vector<1x64xf32>
    %190 = vector.extract_strided_slice %154 {offsets = [3, 0], sizes = [1, 64], strides = [1, 1]} : vector<4x64xf32> to vector<1x64xf32>
    %191 = arith.subf %190, %152 : vector<1x64xf32>
    %192 = math.absf %191 : vector<1x64xf32>
    %cst_48 = arith.constant 1.000000e+00 : f32
    %193 = vector.broadcast %cst_48 : f32 to vector<1x64xf32>
    %194 = arith.cmpf olt, %192, %193 : vector<1x64xf32>
    %cst_49 = arith.constant 5.000000e-01 : f32
    %195 = vector.broadcast %cst_49 : f32 to vector<1x64xf32>
    %196 = arith.mulf %195, %192 : vector<1x64xf32>
    %197 = arith.mulf %196, %192 : vector<1x64xf32>
    %cst_50 = arith.constant 5.000000e-01 : f32
    %198 = vector.broadcast %cst_50 : f32 to vector<1x64xf32>
    %199 = arith.subf %192, %198 : vector<1x64xf32>
    %200 = arith.select %194, %197, %199 : vector<1x64xi1>, vector<1x64xf32>
    %201 = arith.addf %189, %200 : vector<1x64xf32>
    %cst_51 = arith.constant 0.000000e+00 : f32
    %202 = vector.broadcast %cst_51 : f32 to vector<1x64xf32>
    %203 = arith.cmpf ogt, %132, %202 : vector<1x64xf32>
    %cst_52 = arith.constant 0.000000e+00 : f32
    %204 = vector.broadcast %cst_52 : f32 to vector<1x64xf32>
    %205 = arith.select %203, %201, %204 : vector<1x64xi1>, vector<1x64xf32>
    %c0_53 = arith.constant 0 : index
    %c0_54 = arith.constant 0 : index
    %c0_55 = arith.constant 0 : index
    %206 = vector.load %arg4[%c0_53, %c0_54, %c0_55] : memref<2x1x64xf32, #tpu.memory_space<vmem>>, vector<1x1x64xf32>
    %207 = vector.shape_cast %206 : vector<1x1x64xf32> to vector<1x64xf32>
    %208 = vector.shape_cast %132 : vector<1x64xf32> to vector<1x1x64xf32>
    tpu.vector_store %arg4[%c0_53, %c0_54, %c0_55], %208 {strides = array<i32>} : memref<2x1x64xf32, #tpu.memory_space<vmem>>, vector<1x1x64xf32>,
    %209 = vector.shape_cast %205 : vector<1x64xf32> to vector<1x1x64xf32>
    %cst_56 = arith.constant dense<0.000000e+00> : vector<1xf32>
    %210 = vector.multi_reduction <add>, %209, %cst_56 [1, 2] : vector<1x1x64xf32> to vector<1xf32>
    %211 = vector.shape_cast %210 : vector<1xf32> to vector<1x1x1xf32>
    %212 = vector.extract %211[0, 0, 0] : f32 from vector<1x1x1xf32>
    %213 = vector.broadcast %212 : f32 to vector<1x1xf32>
    %c0_57 = arith.constant 0 : index
    %c0_58 = arith.constant 0 : index
    %c0_59 = arith.constant 0 : index
    %214 = vector.load %arg5[%c0_57, %c0_58, %c0_59] : memref<2x1x1xf32, #tpu.memory_space<vmem>>, vector<1x1x1xf32>
    %215 = vector.shape_cast %214 : vector<1x1x1xf32> to vector<1x1xf32>
    %216 = vector.shape_cast %213 : vector<1x1xf32> to vector<1x1x1xf32>
    tpu.vector_store %arg5[%c0_57, %c0_58, %c0_59], %216 {strides = array<i32>} : memref<2x1x1xf32, #tpu.memory_space<vmem>>, vector<1x1x1xf32>,
    %c1 = arith.constant 1 : index
    %c0_60 = arith.constant 0 : index
    %c0_61 = arith.constant 0 : index
    %217 = vector.load %arg2[%c1, %c0_60, %c0_61] : memref<2x3x5xf32, #tpu.memory_space<vmem>>, vector<1x3x5xf32>
    %218 = vector.shape_cast %217 : vector<1x3x5xf32> to vector<3x5xf32>
    %219 = vector.extract_strided_slice %218 {offsets = [0, 0], sizes = [3, 1], strides = [1, 1]} : vector<3x5xf32> to vector<3x1xf32>
    %220 = vector.extract_strided_slice %218 {offsets = [0, 1], sizes = [3, 1], strides = [1, 1]} : vector<3x5xf32> to vector<3x1xf32>
    %221 = vector.extract_strided_slice %218 {offsets = [0, 2], sizes = [3, 1], strides = [1, 1]} : vector<3x5xf32> to vector<3x1xf32>
    %222 = vector.extract_strided_slice %218 {offsets = [0, 3], sizes = [3, 1], strides = [1, 1]} : vector<3x5xf32> to vector<3x1xf32>
    %223 = vector.extract_strided_slice %218 {offsets = [0, 4], sizes = [3, 1], strides = [1, 1]} : vector<3x5xf32> to vector<3x1xf32>
    %224 = arith.subf %221, %219 : vector<3x1xf32>
    %225 = arith.subf %222, %220 : vector<3x1xf32>
    %226 = arith.mulf %224, %225 : vector<3x1xf32>
    %227 = vector.broadcast %7 : vector<1x64xf32> to vector<3x64xf32>
    %228 = vector.broadcast %219 : vector<3x1xf32> to vector<3x64xf32>
    %229 = arith.maximumf %227, %228 : vector<3x64xf32>
    %230 = vector.broadcast %10 : vector<1x64xf32> to vector<3x64xf32>
    %231 = vector.broadcast %220 : vector<3x1xf32> to vector<3x64xf32>
    %232 = arith.maximumf %230, %231 : vector<3x64xf32>
    %233 = vector.broadcast %13 : vector<1x64xf32> to vector<3x64xf32>
    %234 = vector.broadcast %221 : vector<3x1xf32> to vector<3x64xf32>
    %235 = arith.minimumf %233, %234 : vector<3x64xf32>
    %236 = vector.broadcast %16 : vector<1x64xf32> to vector<3x64xf32>
    %237 = vector.broadcast %222 : vector<3x1xf32> to vector<3x64xf32>
    %238 = arith.minimumf %236, %237 : vector<3x64xf32>
    %239 = arith.subf %235, %229 : vector<3x64xf32>
    %cst_62 = arith.constant 0.000000e+00 : f32
    %240 = vector.broadcast %cst_62 : f32 to vector<3x64xf32>
    %241 = arith.maximumf %239, %240 : vector<3x64xf32>
    %242 = arith.subf %238, %232 : vector<3x64xf32>
    %cst_63 = arith.constant 0.000000e+00 : f32
    %243 = vector.broadcast %cst_63 : f32 to vector<3x64xf32>
    %244 = arith.maximumf %242, %243 : vector<3x64xf32>
    %245 = arith.mulf %241, %244 : vector<3x64xf32>
    %246 = vector.broadcast %17 : vector<1x64xf32> to vector<3x64xf32>
    %247 = vector.broadcast %226 : vector<3x1xf32> to vector<3x64xf32>
    %248 = arith.addf %246, %247 : vector<3x64xf32>
    %249 = arith.subf %248, %245 : vector<3x64xf32>
    %250 = tpu.reciprocal %249 {approx = true} : vector<3x64xf32> -> vector<3x64xf32>
    %251 = arith.mulf %245, %250 : vector<3x64xf32>
    %cst_64 = arith.constant dense<0xFF800000> : vector<64xf32>
    %252 = vector.multi_reduction <maximumf>, %251, %cst_64 [0] : vector<3x64xf32> to vector<64xf32>
    %253 = vector.shape_cast %252 : vector<64xf32> to vector<1x64xf32>
    %254 = vector.broadcast %253 : vector<1x64xf32> to vector<3x64xf32>
    %255 = arith.cmpf oeq, %251, %254 : vector<3x64xf32>
    %c3_i32_65 = arith.constant 3 : i32
    %256 = vector.broadcast %c3_i32_65 : i32 to vector<3x64xi32>
    %257 = arith.select %255, %26, %256 : vector<3x64xi1>, vector<3x64xi32>
    %cst_66 = arith.constant dense<2147483647> : vector<64xi32>
    %258 = vector.multi_reduction <minsi>, %257, %cst_66 [0] : vector<3x64xi32> to vector<64xi32>
    %259 = vector.shape_cast %258 : vector<64xi32> to vector<1x64xi32>
    %cst_67 = arith.constant dense<0xFF800000> : vector<3xf32>
    %260 = vector.multi_reduction <maximumf>, %251, %cst_67 [1] : vector<3x64xf32> to vector<3xf32>
    %261 = vector.shape_cast %260 : vector<3xf32> to vector<3x1xf32>
    %262 = vector.broadcast %261 : vector<3x1xf32> to vector<3x64xf32>
    %263 = arith.cmpf oeq, %251, %262 : vector<3x64xf32>
    %c64_i32_68 = arith.constant 64 : i32
    %264 = vector.broadcast %c64_i32_68 : i32 to vector<3x64xi32>
    %265 = arith.select %263, %27, %264 : vector<3x64xi1>, vector<3x64xi32>
    %cst_69 = arith.constant dense<2147483647> : vector<3xi32>
    %266 = vector.multi_reduction <minsi>, %265, %cst_69 [1] : vector<3x64xi32> to vector<3xi32>
    %267 = vector.shape_cast %266 : vector<3xi32> to vector<3x1xi32>
    %268 = vector.broadcast %267 : vector<3x1xi32> to vector<3x64xi32>
    %269 = arith.cmpi eq, %268, %27 : vector<3x64xi32>
    %270 = arith.extui %269 : vector<3x64xi1> to vector<3x64xi32>
    %cst_70 = arith.constant dense<-2147483648> : vector<64xi32>
    %271 = vector.multi_reduction <maxsi>, %270, %cst_70 [0] : vector<3x64xi32> to vector<64xi32>
    %272 = vector.shape_cast %271 : vector<64xi32> to vector<1x64xi32>
    %c0_i32_71 = arith.constant 0 : i32
    %273 = vector.broadcast %c0_i32_71 : i32 to vector<1x64xi32>
    %274 = arith.cmpi sgt, %272, %273 : vector<1x64xi32>
    %cst_72 = arith.constant 2.000000e+00 : f32
    %275 = vector.broadcast %cst_72 : f32 to vector<1x64xf32>
    %276 = arith.select %274, %275, %253 : vector<1x64xi1>, vector<1x64xf32>
    %c-1_i32_73 = arith.constant -1 : i32
    %277 = vector.broadcast %c-1_i32_73 : i32 to vector<3x64xi32>
    %278 = arith.select %269, %26, %277 : vector<3x64xi1>, vector<3x64xi32>
    %cst_74 = arith.constant dense<-2147483648> : vector<64xi32>
    %279 = vector.multi_reduction <maxsi>, %278, %cst_74 [0] : vector<3x64xi32> to vector<64xi32>
    %280 = vector.shape_cast %279 : vector<64xi32> to vector<1x64xi32>
    %c0_i32_75 = arith.constant 0 : i32
    %281 = vector.broadcast %c0_i32_75 : i32 to vector<1x64xi32>
    %282 = arith.cmpi sge, %280, %281 : vector<1x64xi32>
    %283 = arith.select %282, %280, %259 : vector<1x64xi1>, vector<1x64xi32>
    %284 = vector.broadcast %283 : vector<1x64xi32> to vector<3x64xi32>
    %285 = arith.cmpi eq, %284, %26 : vector<3x64xi32>
    %cst_76 = arith.constant 0.000000e+00 : f32
    %286 = vector.shape_cast %219 : vector<3x1xf32> to vector<3x1xf32>
    %287 = vector.broadcast %286 : vector<3x1xf32> to vector<3x64xf32>
    %288 = vector.broadcast %cst_76 : f32 to vector<3x64xf32>
    %289 = arith.select %285, %287, %288 : vector<3x64xi1>, vector<3x64xf32>
    %cst_77 = arith.constant dense<0.000000e+00> : vector<64xf32>
    %290 = vector.multi_reduction <add>, %289, %cst_77 [0] : vector<3x64xf32> to vector<64xf32>
    %291 = vector.shape_cast %290 : vector<64xf32> to vector<1x64xf32>
    %cst_78 = arith.constant 0.000000e+00 : f32
    %292 = vector.shape_cast %220 : vector<3x1xf32> to vector<3x1xf32>
    %293 = vector.broadcast %292 : vector<3x1xf32> to vector<3x64xf32>
    %294 = vector.broadcast %cst_78 : f32 to vector<3x64xf32>
    %295 = arith.select %285, %293, %294 : vector<3x64xi1>, vector<3x64xf32>
    %cst_79 = arith.constant dense<0.000000e+00> : vector<64xf32>
    %296 = vector.multi_reduction <add>, %295, %cst_79 [0] : vector<3x64xf32> to vector<64xf32>
    %297 = vector.shape_cast %296 : vector<64xf32> to vector<1x64xf32>
    %cst_80 = arith.constant 0.000000e+00 : f32
    %298 = vector.shape_cast %221 : vector<3x1xf32> to vector<3x1xf32>
    %299 = vector.broadcast %298 : vector<3x1xf32> to vector<3x64xf32>
    %300 = vector.broadcast %cst_80 : f32 to vector<3x64xf32>
    %301 = arith.select %285, %299, %300 : vector<3x64xi1>, vector<3x64xf32>
    %cst_81 = arith.constant dense<0.000000e+00> : vector<64xf32>
    %302 = vector.multi_reduction <add>, %301, %cst_81 [0] : vector<3x64xf32> to vector<64xf32>
    %303 = vector.shape_cast %302 : vector<64xf32> to vector<1x64xf32>
    %cst_82 = arith.constant 0.000000e+00 : f32
    %304 = vector.shape_cast %222 : vector<3x1xf32> to vector<3x1xf32>
    %305 = vector.broadcast %304 : vector<3x1xf32> to vector<3x64xf32>
    %306 = vector.broadcast %cst_82 : f32 to vector<3x64xf32>
    %307 = arith.select %285, %305, %306 : vector<3x64xi1>, vector<3x64xf32>
    %cst_83 = arith.constant dense<0.000000e+00> : vector<64xf32>
    %308 = vector.multi_reduction <add>, %307, %cst_83 [0] : vector<3x64xf32> to vector<64xf32>
    %309 = vector.shape_cast %308 : vector<64xf32> to vector<1x64xf32>
    %cst_84 = arith.constant 0.000000e+00 : f32
    %310 = vector.shape_cast %223 : vector<3x1xf32> to vector<3x1xf32>
    %311 = vector.broadcast %310 : vector<3x1xf32> to vector<3x64xf32>
    %312 = vector.broadcast %cst_84 : f32 to vector<3x64xf32>
    %313 = arith.select %285, %311, %312 : vector<3x64xi1>, vector<3x64xf32>
    %cst_85 = arith.constant dense<0.000000e+00> : vector<64xf32>
    %314 = vector.multi_reduction <add>, %313, %cst_85 [0] : vector<3x64xf32> to vector<64xf32>
    %315 = vector.shape_cast %314 : vector<64xf32> to vector<1x64xf32>
    %cst_86 = arith.constant 5.000000e-01 : f32
    %316 = vector.broadcast %cst_86 : f32 to vector<1x64xf32>
    %317 = arith.cmpf olt, %276, %316 : vector<1x64xf32>
    %cst_87 = arith.constant 1.000000e+00 : f32
    %318 = vector.broadcast %cst_87 : f32 to vector<1x64xf32>
    %319 = arith.addf %315, %318 : vector<1x64xf32>
    %cst_88 = arith.constant 0.000000e+00 : f32
    %320 = vector.broadcast %cst_88 : f32 to vector<1x64xf32>
    %321 = arith.select %317, %320, %319 : vector<1x64xi1>, vector<1x64xf32>
    %322 = arith.addf %291, %303 : vector<1x64xf32>
    %cst_89 = arith.constant 5.000000e-01 : f32
    %323 = vector.broadcast %cst_89 : f32 to vector<1x64xf32>
    %324 = arith.mulf %322, %323 : vector<1x64xf32>
    %325 = arith.subf %324, %1 : vector<1x64xf32>
    %326 = arith.mulf %325, %22 : vector<1x64xf32>
    %327 = arith.addf %297, %309 : vector<1x64xf32>
    %cst_90 = arith.constant 5.000000e-01 : f32
    %328 = vector.broadcast %cst_90 : f32 to vector<1x64xf32>
    %329 = arith.mulf %327, %328 : vector<1x64xf32>
    %330 = arith.subf %329, %2 : vector<1x64xf32>
    %331 = arith.mulf %330, %25 : vector<1x64xf32>
    %332 = arith.subf %303, %291 : vector<1x64xf32>
    %333 = arith.mulf %332, %18 : vector<1x64xf32>
    %334 = math.log %333 : vector<1x64xf32>
    %cst_91 = arith.constant 5.000000e+00 : f32
    %335 = vector.broadcast %cst_91 : f32 to vector<1x64xf32>
    %336 = arith.mulf %334, %335 : vector<1x64xf32>
    %337 = arith.subf %309, %297 : vector<1x64xf32>
    %338 = arith.mulf %337, %19 : vector<1x64xf32>
    %339 = math.log %338 : vector<1x64xf32>
    %cst_92 = arith.constant 5.000000e+00 : f32
    %340 = vector.broadcast %cst_92 : f32 to vector<1x64xf32>
    %341 = arith.mulf %339, %340 : vector<1x64xf32>
    %c1_93 = arith.constant 1 : index
    %c0_94 = arith.constant 0 : index
    %c0_95 = arith.constant 0 : index
    %342 = vector.load %arg3[%c1_93, %c0_94, %c0_95] : memref<2x4x64xf32, #tpu.memory_space<vmem>>, vector<1x4x64xf32>
    %343 = vector.shape_cast %342 : vector<1x4x64xf32> to vector<4x64xf32>
    %344 = vector.extract_strided_slice %343 {offsets = [0, 0], sizes = [1, 64], strides = [1, 1]} : vector<4x64xf32> to vector<1x64xf32>
    %345 = arith.subf %344, %326 : vector<1x64xf32>
    %346 = math.absf %345 : vector<1x64xf32>
    %cst_96 = arith.constant 1.000000e+00 : f32
    %347 = vector.broadcast %cst_96 : f32 to vector<1x64xf32>
    %348 = arith.cmpf olt, %346, %347 : vector<1x64xf32>
    %cst_97 = arith.constant 5.000000e-01 : f32
    %349 = vector.broadcast %cst_97 : f32 to vector<1x64xf32>
    %350 = arith.mulf %349, %346 : vector<1x64xf32>
    %351 = arith.mulf %350, %346 : vector<1x64xf32>
    %cst_98 = arith.constant 5.000000e-01 : f32
    %352 = vector.broadcast %cst_98 : f32 to vector<1x64xf32>
    %353 = arith.subf %346, %352 : vector<1x64xf32>
    %354 = arith.select %348, %351, %353 : vector<1x64xi1>, vector<1x64xf32>
    %355 = vector.extract_strided_slice %343 {offsets = [1, 0], sizes = [1, 64], strides = [1, 1]} : vector<4x64xf32> to vector<1x64xf32>
    %356 = arith.subf %355, %331 : vector<1x64xf32>
    %357 = math.absf %356 : vector<1x64xf32>
    %cst_99 = arith.constant 1.000000e+00 : f32
    %358 = vector.broadcast %cst_99 : f32 to vector<1x64xf32>
    %359 = arith.cmpf olt, %357, %358 : vector<1x64xf32>
    %cst_100 = arith.constant 5.000000e-01 : f32
    %360 = vector.broadcast %cst_100 : f32 to vector<1x64xf32>
    %361 = arith.mulf %360, %357 : vector<1x64xf32>
    %362 = arith.mulf %361, %357 : vector<1x64xf32>
    %cst_101 = arith.constant 5.000000e-01 : f32
    %363 = vector.broadcast %cst_101 : f32 to vector<1x64xf32>
    %364 = arith.subf %357, %363 : vector<1x64xf32>
    %365 = arith.select %359, %362, %364 : vector<1x64xi1>, vector<1x64xf32>
    %366 = arith.addf %354, %365 : vector<1x64xf32>
    %367 = vector.extract_strided_slice %343 {offsets = [2, 0], sizes = [1, 64], strides = [1, 1]} : vector<4x64xf32> to vector<1x64xf32>
    %368 = arith.subf %367, %336 : vector<1x64xf32>
    %369 = math.absf %368 : vector<1x64xf32>
    %cst_102 = arith.constant 1.000000e+00 : f32
    %370 = vector.broadcast %cst_102 : f32 to vector<1x64xf32>
    %371 = arith.cmpf olt, %369, %370 : vector<1x64xf32>
    %cst_103 = arith.constant 5.000000e-01 : f32
    %372 = vector.broadcast %cst_103 : f32 to vector<1x64xf32>
    %373 = arith.mulf %372, %369 : vector<1x64xf32>
    %374 = arith.mulf %373, %369 : vector<1x64xf32>
    %cst_104 = arith.constant 5.000000e-01 : f32
    %375 = vector.broadcast %cst_104 : f32 to vector<1x64xf32>
    %376 = arith.subf %369, %375 : vector<1x64xf32>
    %377 = arith.select %371, %374, %376 : vector<1x64xi1>, vector<1x64xf32>
    %378 = arith.addf %366, %377 : vector<1x64xf32>
    %379 = vector.extract_strided_slice %343 {offsets = [3, 0], sizes = [1, 64], strides = [1, 1]} : vector<4x64xf32> to vector<1x64xf32>
    %380 = arith.subf %379, %341 : vector<1x64xf32>
    %381 = math.absf %380 : vector<1x64xf32>
    %cst_105 = arith.constant 1.000000e+00 : f32
    %382 = vector.broadcast %cst_105 : f32 to vector<1x64xf32>
    %383 = arith.cmpf olt, %381, %382 : vector<1x64xf32>
    %cst_106 = arith.constant 5.000000e-01 : f32
    %384 = vector.broadcast %cst_106 : f32 to vector<1x64xf32>
    %385 = arith.mulf %384, %381 : vector<1x64xf32>
    %386 = arith.mulf %385, %381 : vector<1x64xf32>
    %cst_107 = arith.constant 5.000000e-01 : f32
    %387 = vector.broadcast %cst_107 : f32 to vector<1x64xf32>
    %388 = arith.subf %381, %387 : vector<1x64xf32>
    %389 = arith.select %383, %386, %388 : vector<1x64xi1>, vector<1x64xf32>
    %390 = arith.addf %378, %389 : vector<1x64xf32>
    %cst_108 = arith.constant 0.000000e+00 : f32
    %391 = vector.broadcast %cst_108 : f32 to vector<1x64xf32>
    %392 = arith.cmpf ogt, %321, %391 : vector<1x64xf32>
    %cst_109 = arith.constant 0.000000e+00 : f32
    %393 = vector.broadcast %cst_109 : f32 to vector<1x64xf32>
    %394 = arith.select %392, %390, %393 : vector<1x64xi1>, vector<1x64xf32>
    %c1_110 = arith.constant 1 : index
    %c0_111 = arith.constant 0 : index
    %c0_112 = arith.constant 0 : index
    %395 = vector.load %arg4[%c1_110, %c0_111, %c0_112] : memref<2x1x64xf32, #tpu.memory_space<vmem>>, vector<1x1x64xf32>
    %396 = vector.shape_cast %395 : vector<1x1x64xf32> to vector<1x64xf32>
    %397 = vector.shape_cast %321 : vector<1x64xf32> to vector<1x1x64xf32>
    tpu.vector_store %arg4[%c1_110, %c0_111, %c0_112], %397 {strides = array<i32>} : memref<2x1x64xf32, #tpu.memory_space<vmem>>, vector<1x1x64xf32>,
    %398 = vector.shape_cast %394 : vector<1x64xf32> to vector<1x1x64xf32>
    %cst_113 = arith.constant dense<0.000000e+00> : vector<1xf32>
    %399 = vector.multi_reduction <add>, %398, %cst_113 [1, 2] : vector<1x1x64xf32> to vector<1xf32>
    %400 = vector.shape_cast %399 : vector<1xf32> to vector<1x1x1xf32>
    %401 = vector.extract %400[0, 0, 0] : f32 from vector<1x1x1xf32>
    %402 = vector.broadcast %401 : f32 to vector<1x1xf32>
    %c1_114 = arith.constant 1 : index
    %c0_115 = arith.constant 0 : index
    %c0_116 = arith.constant 0 : index
    %403 = vector.load %arg5[%c1_114, %c0_115, %c0_116] : memref<2x1x1xf32, #tpu.memory_space<vmem>>, vector<1x1x1xf32>
    %404 = vector.shape_cast %403 : vector<1x1x1xf32> to vector<1x1xf32>
    %405 = vector.shape_cast %402 : vector<1x1xf32> to vector<1x1x1xf32>
    tpu.vector_store %arg5[%c1_114, %c0_115, %c0_116], %405 {strides = array<i32>} : memref<2x1x1xf32, #tpu.memory_space<vmem>>, vector<1x1x1xf32>,
    return
  }
  func.func @transform_0(%arg0: i32) -> (i32, i32) {
    %c0_i32 = arith.constant 0 : i32
    %c0_i32_0 = arith.constant 0 : i32
    %c0_i32_1 = arith.constant 0 : i32
    return %c0_i32, %c0_i32_0 : i32, i32
  }
  func.func @transform_1(%arg0: i32) -> (i32, i32, i32) {
    %c0_i32 = arith.constant 0 : i32
    %c0_i32_0 = arith.constant 0 : i32
    %c0_i32_1 = arith.constant 0 : i32
    return %arg0, %c0_i32, %c0_i32_0 : i32, i32, i32
  }
  func.func @transform_2(%arg0: i32) -> (i32, i32, i32) {
    %c0_i32 = arith.constant 0 : i32
    %c0_i32_0 = arith.constant 0 : i32
    %c0_i32_1 = arith.constant 0 : i32
    return %arg0, %c0_i32, %c0_i32_0 : i32, i32, i32
  }
  func.func @transform_3(%arg0: i32) -> (i32, i32, i32) {
    %c0_i32 = arith.constant 0 : i32
    %c0_i32_0 = arith.constant 0 : i32
    %c0_i32_1 = arith.constant 0 : i32
    return %arg0, %c0_i32, %c0_i32_0 : i32, i32, i32
  }
  func.func @transform_4(%arg0: i32) -> (i32, i32, i32) {
    %c0_i32 = arith.constant 0 : i32
    %c0_i32_0 = arith.constant 0 : i32
    %c0_i32_1 = arith.constant 0 : i32
    return %arg0, %c0_i32, %c0_i32_0 : i32, i32, i32
  }
}

module attributes {stable_mosaic.version = 11 : i64} {
  func.func @_conf_loss_kernel(%arg0: i32, %arg1: memref<5x128xf32, #tpu.memory_space<vmem>>, %arg2: memref<1x128xi32, #tpu.memory_space<vmem>>, %arg3: memref<1x128xf32, #tpu.memory_space<vmem>>) attributes {dimension_semantics = [#tpu.dimension_semantics<parallel>], iteration_bounds = array<i64: 1>, scalar_prefetch = 0 : i64, scratch_operands = 0 : i64, tpu.core_type = #tpu.core_type<tc>, window_params = [{transform_indices = @transform_0, window_bounds = array<i64: 5, 128>}, {transform_indices = @transform_1, window_bounds = array<i64: 1, 128>}, {transform_indices = @transform_2, window_bounds = array<i64: 1, 128>}]} {
    %c0 = arith.constant 0 : index
    %c0_0 = arith.constant 0 : index
    %0 = vector.load %arg1[%c0, %c0_0] : memref<5x128xf32, #tpu.memory_space<vmem>>, vector<5x128xf32>
    %c0_1 = arith.constant 0 : index
    %c0_2 = arith.constant 0 : index
    %1 = vector.load %arg2[%c0_1, %c0_2] : memref<1x128xi32, #tpu.memory_space<vmem>>, vector<1x128xi32>
    %cst = arith.constant dense<0xFF800000> : vector<128xf32>
    %2 = vector.multi_reduction <maximumf>, %0, %cst [0] : vector<5x128xf32> to vector<128xf32>
    %3 = vector.shape_cast %2 : vector<128xf32> to vector<1x128xf32>
    %4 = vector.broadcast %3 : vector<1x128xf32> to vector<5x128xf32>
    %5 = arith.subf %0, %4 : vector<5x128xf32>
    %6 = math.exp %5 : vector<5x128xf32>
    %cst_3 = arith.constant dense<0.000000e+00> : vector<128xf32>
    %7 = vector.multi_reduction <add>, %6, %cst_3 [0] : vector<5x128xf32> to vector<128xf32>
    %8 = vector.shape_cast %7 : vector<128xf32> to vector<1x128xf32>
    %9 = math.log %8 : vector<1x128xf32>
    %10 = arith.addf %9, %3 : vector<1x128xf32>
    %11 = tpu.iota {dimensions = array<i32: 0>} : vector<5x128xi32>
    %12 = vector.broadcast %1 : vector<1x128xi32> to vector<5x128xi32>
    %13 = arith.cmpi eq, %11, %12 : vector<5x128xi32>
    %cst_4 = arith.constant 0.000000e+00 : f32
    %14 = vector.broadcast %cst_4 : f32 to vector<5x128xf32>
    %15 = arith.select %13, %0, %14 : vector<5x128xi1>, vector<5x128xf32>
    %cst_5 = arith.constant dense<0.000000e+00> : vector<128xf32>
    %16 = vector.multi_reduction <add>, %15, %cst_5 [0] : vector<5x128xf32> to vector<128xf32>
    %17 = vector.shape_cast %16 : vector<128xf32> to vector<1x128xf32>
    %18 = arith.subf %10, %17 : vector<1x128xf32>
    %c0_6 = arith.constant 0 : index
    %c0_7 = arith.constant 0 : index
    %19 = vector.load %arg3[%c0_6, %c0_7] : memref<1x128xf32, #tpu.memory_space<vmem>>, vector<1x128xf32>
    tpu.vector_store %arg3[%c0_6, %c0_7], %18 {strides = array<i32>} : memref<1x128xf32, #tpu.memory_space<vmem>>, vector<1x128xf32>,
    return
  }
  func.func @transform_0(%arg0: i32) -> (i32, i32) {
    %c0_i32 = arith.constant 0 : i32
    %c0_i32_0 = arith.constant 0 : i32
    return %c0_i32, %arg0 : i32, i32
  }
  func.func @transform_1(%arg0: i32) -> (i32, i32) {
    %c0_i32 = arith.constant 0 : i32
    %c0_i32_0 = arith.constant 0 : i32
    return %c0_i32, %arg0 : i32, i32
  }
  func.func @transform_2(%arg0: i32) -> (i32, i32) {
    %c0_i32 = arith.constant 0 : i32
    %c0_i32_0 = arith.constant 0 : i32
    return %c0_i32, %arg0 : i32, i32
  }
}

module attributes {stable_mosaic.version = 11 : i64} {
  func.func @_conf_sum_kernel(%arg0: memref<2x64xf32, #tpu.memory_space<vmem>>, %arg1: memref<2x64xf32, #tpu.memory_space<vmem>>, %arg2: memref<1x1xf32, #tpu.memory_space<smem>>) attributes {dimension_semantics = [], scalar_prefetch = 0 : i64, scratch_operands = 0 : i64, tpu.core_type = #tpu.core_type<tc>} {
    %c0 = arith.constant 0 : index
    %c0_0 = arith.constant 0 : index
    %0 = vector.load %arg0[%c0, %c0_0] : memref<2x64xf32, #tpu.memory_space<vmem>>, vector<2x64xf32>
    %c0_1 = arith.constant 0 : index
    %c0_2 = arith.constant 0 : index
    %1 = vector.load %arg1[%c0_1, %c0_2] : memref<2x64xf32, #tpu.memory_space<vmem>>, vector<2x64xf32>
    %2 = arith.mulf %0, %1 : vector<2x64xf32>
    %3 = vector.shape_cast %2 : vector<2x64xf32> to vector<1x2x64xf32>
    %cst = arith.constant dense<0.000000e+00> : vector<1xf32>
    %4 = vector.multi_reduction <add>, %3, %cst [1, 2] : vector<1x2x64xf32> to vector<1xf32>
    %5 = vector.shape_cast %4 : vector<1xf32> to vector<1x1x1xf32>
    %6 = vector.extract %5[0, 0, 0] : f32 from vector<1x1x1xf32>
    %c0_3 = arith.constant 0 : index
    %c0_4 = arith.constant 0 : index
    %7 = memref.load %arg2[%c0_3, %c0_4] : memref<1x1xf32, #tpu.memory_space<smem>>
    memref.store %6, %arg2[%c0_3, %c0_4] : memref<1x1xf32, #tpu.memory_space<smem>>
    return
  }
}

</mosaic_0001>

<llo_original>
// kernel: multibox_loss.4
$region0: #{multibox_loss.4}
  #allocation0 [shape = 'u32[]', space=smem, size = 0x4, offset = 0x4, fixed_abs, tag = 'smem constant byte address 0x4 - core index']
  #allocation1 [shape = 'u32[144,128]{1,0:T(1,128)}', space=vmem, size = 0x12000, scoped, tag = 'internal scratch']
  %s0 = inlined_call_operand.vmem [shape: f32[5,128], index: 0, kind: input, shape index: {}]
  %s1 = inlined_call_operand.vmem [shape: s32[1,128], index: 1, kind: input, shape index: {}]
  %s2 = inlined_call_operand.vmem [shape: f32[1,128], index: 2, kind: output, shape index: {}]
  %s3 = sld [smem:[#allocation0]]
  $region18: #{multibox_loss.4} parent=0
    _
  %s5 = ssub.s32 1, %s3
  %s6 = scalar_select 0, %s5, %s3
  // Predicated region
  $region2: #{multibox_loss.4} parent=0 // pred_check
    _
  $region3: #{multibox_loss.4} parent=0 // pred_check_branch
    %8 = sbr.rel (0) target = $region5
  $region4: #{multibox_loss.4} parent=0 // pred_region
    _
  $region5: #{multibox_loss.4} parent=0 // pred_fallthru
    _
  // Predicated region
  $region6: #{multibox_loss.4} parent=0 // pred_check
    _
  $region7: #{multibox_loss.4} parent=0 // pred_check_branch
    %10 = sbr.rel (0) target = $region9
  $region8: #{multibox_loss.4} parent=0 // pred_region
    _
  $region9: #{multibox_loss.4} parent=0 // pred_fallthru
    _
  %v11 = vld [vmem:[%s0] sm:$0x1f]
  %v12 = vld [vmem:[%s1] sm:$0x1]
  %vm13 = vcmask 1044480
  %v14 = vsel %vm13, %v11, -inf
  %v15 = vrot.slane %v14, 4
  %v16 = vmax.f32 %v14, %v15
  %v17 = vrot.slane %v16, 2
  %v18 = vmax.f32 %v16, %v17
  %v19 = vrot.slane %v18, 1
  %v20 = vmax.f32 %v18, %v19
  %v21 = vsub.f32 %v11, %v20
  %v22 = vmul.f32 %v21, 1.442695
  %v23 = vpow.pop %v22
  %v24 = vsel %vm13, %v23, 0.0
  %v25 = vrot.slane %v24, 4
  %v26 = vadd.f32 %v24, %v25
  %v27 = vrot.slane %v26, 2
  %v28 = vadd.f32 %v26, %v27
  %v29 = vrot.slane %v28, 1
  %v30 = vadd.f32 %v28, %v29
  %v31 = vlog2.pop %v30
  %v32 = vmul.f32 %v31, 0.6931472
  %v33 = vadd.f32 %v32, %v20
  %v34 = vlaneseq
  %v35 = vshrl.u32 %v34, 7
  %v36 = vlaneseq
  %v37 = vshrl.u32 %v36, 7
  %v38 = vsub.s32 0, %v37
  %v39 = vrot.slane %v12, %v38
  %vm40 = vcmp.eq.s32.totalorder %v35, %v39
  %v41 = vsel %vm40, %v11, 0.0
  %v42 = vsel %vm13, %v41, 0.0
  %v43 = vrot.slane %v42, 4
  %v44 = vadd.f32 %v42, %v43
  %v45 = vrot.slane %v44, 2
  %v46 = vadd.f32 %v44, %v45
  %v47 = vrot.slane %v46, 1
  %v48 = vadd.f32 %v46, %v47
  %v49 = vsub.f32 %v33, %v48
  %50 = vst [vmem:[%s2] sm:$0x1] %v49
  // Predicated region
  $region10: #{multibox_loss.4} parent=0 // pred_check
    _
  $region11: #{multibox_loss.4} parent=0 // pred_check_branch
    %52 = sbr.rel (0) target = $region13
  $region12: #{multibox_loss.4} parent=0 // pred_region
    _
  $region13: #{multibox_loss.4} parent=0 // pred_fallthru
    _
  // Predicated region
  $region14: #{multibox_loss.4} parent=0 // pred_check
    _
  $region15: #{multibox_loss.4} parent=0 // pred_check_branch
    %54 = sbr.rel (0) target = $region17
  $region16: #{multibox_loss.4} parent=0 // pred_region
    _
  $region17: #{multibox_loss.4} parent=0 // pred_fallthru
    _

// kernel: multibox_loss.5
$region0: #{multibox_loss.5}
  #allocation0 [shape = 'u32[]', space=smem, size = 0x4, offset = 0x4, fixed_abs, tag = 'smem constant byte address 0x4 - core index']
  #allocation1 [shape = 'u32[144,128]{1,0:T(1,128)}', space=vmem, size = 0x12000, scoped, tag = 'internal scratch']
  %s0 = inlined_call_operand.vmem [shape: f32[2,64], index: 0, kind: input, shape index: {}]
  %s1 = inlined_call_operand.vmem [shape: f32[2,64], index: 1, kind: input, shape index: {}]
  %s2 = inlined_call_operand.hbm [shape: f32[1,1], index: 2, kind: output, shape index: {}]
  %s3 = sld [smem:[#allocation0]]
  $region18: #{multibox_loss.5} parent=0
    _
  %s5 = ssub.s32 1, %s3
  %s6 = scalar_select 0, %s5, %s3
  $region1: #{multibox_loss.5} parent=0
    #allocation2 [shape = 'u8[512]{0}', space=smem, size = 0x200, scoped, tag = 'output window, operand 0, single buffered']
    #allocation3 [shape = 's32[1]{0}', space=sflag, size = 0x4, scoped, tag = 'scoped memory for multibox_loss.5']
    %7 = vsyncpa [#allocation3], 0
    // Predicated region
    $region2: #{multibox_loss.5} parent=1 // pred_check
      _
    $region3: #{multibox_loss.5} parent=1 // pred_check_branch
      %9 = sbr.rel (0) target = $region5
    $region4: #{multibox_loss.5} parent=1 // pred_region
      _
    $region5: #{multibox_loss.5} parent=1 // pred_fallthru
      _
    // Predicated region
    $region6: #{multibox_loss.5} parent=1 // pred_check
      _
    $region7: #{multibox_loss.5} parent=1 // pred_check_branch
      %11 = sbr.rel (0) target = $region9
    $region8: #{multibox_loss.5} parent=1 // pred_region
      _
    $region9: #{multibox_loss.5} parent=1 // pred_fallthru
      _
    %v12 = vld [vmem:[%s0] sm:$0x3]
    %v13 = vld [vmem:[%s1] sm:$0x3]
    %v14 = vmul.f32 %v12, %v13
    %vm15 = vcmask 517120
    %v16 = vsel %vm15, %v14, 0.0
    %17 = vadd.xlane.f32.xlu0 %v16
    %v18 = vpop.xlane.xlu0 %17
    %v19 = vrot.slane %v18, 4
    %v20 = vadd.f32 %v18, %v19
    %v21 = vrot.slane %v20, 2
    %v22 = vadd.f32 %v20, %v21
    %v23 = vrot.slane %v22, 1
    %v24 = vadd.f32 %v22, %v23
    %s25 = vtos %v24
    %s26 = scalar_lea.smem [#allocation2], 0
    %27 = sst [smem:[%s26]] %s25
    // Predicated region
    $region10: #{multibox_loss.5} parent=1 // pred_check
      _
    $region11: #{multibox_loss.5} parent=1 // pred_check_branch
      %29 = sbr.rel (0) target = $region13
    $region12: #{multibox_loss.5} parent=1 // pred_region
      %s31 = ssub.s32 16, 16
      %32 = vsyncadd [#allocation3], %s31
      %35 = dma.smem_to_hbm [#allocation2], 16, %s2, [#allocation3]
    $region13: #{multibox_loss.5} parent=1 // pred_fallthru
      _
    // Predicated region
    $region14: #{multibox_loss.5} parent=1 // pred_check
      _
    $region15: #{multibox_loss.5} parent=1 // pred_check_branch
      %37 = sbr.rel (0) target = $region17
    $region16: #{multibox_loss.5} parent=1 // pred_region
      %38 = dma.done [#allocation3], 16
    $region17: #{multibox_loss.5} parent=1 // pred_fallthru
      _
    %39 = sfence
    %40 = vsyncpa [#allocation3], 1

// kernel: multibox_loss.3
$region0: #{multibox_loss.3}
  #allocation0 [shape = 'u32[]', space=smem, size = 0x4, offset = 0x4, fixed_abs, tag = 'smem constant byte address 0x4 - core index']
  #allocation1 [shape = 'u32[144,128]{1,0:T(1,128)}', space=vmem, size = 0x12000, scoped, tag = 'internal scratch']
  %s0 = inlined_call_operand.vmem [shape: f32[4,64], index: 0, kind: input, shape index: {}]
  %s1 = inlined_call_operand.vmem [shape: f32[2,3,5], index: 1, kind: input, shape index: {}]
  %s2 = inlined_call_operand.vmem [shape: f32[2,4,64], index: 2, kind: input, shape index: {}]
  %s3 = inlined_call_operand.vmem [shape: f32[2,1,64], index: 3, kind: output, shape index: {0}]
  %s4 = inlined_call_operand.vmem [shape: f32[2,1,1], index: 4, kind: output, shape index: {1}]
  %5 = xla_tuple %s3, %s4
  %s6 = sld [smem:[#allocation0]]
  $region30: #{multibox_loss.3} parent=0
    _
  %s8 = ssub.s32 1, %s6
  %s9 = scalar_select 0, %s8, %s6
  // Predicated region
  $region2: #{multibox_loss.3} parent=0 // pred_check
    _
  $region3: #{multibox_loss.3} parent=0 // pred_check_branch
    %11 = sbr.rel (0) target = $region5
  $region4: #{multibox_loss.3} parent=0 // pred_region
    _
  $region5: #{multibox_loss.3} parent=0 // pred_fallthru
    _
  // Predicated region
  $region6: #{multibox_loss.3} parent=0 // pred_check
    _
  $region7: #{multibox_loss.3} parent=0 // pred_check_branch
    %13 = sbr.rel (0) target = $region9
  $region8: #{multibox_loss.3} parent=0 // pred_region
    _
  $region9: #{multibox_loss.3} parent=0 // pred_fallthru
    _
  // Predicated region
  $region10: #{multibox_loss.3} parent=0 // pred_check
    _
  $region11: #{multibox_loss.3} parent=0 // pred_check_branch
    %15 = sbr.rel (0) target = $region13
  $region12: #{multibox_loss.3} parent=0 // pred_region
    _
  $region13: #{multibox_loss.3} parent=0 // pred_fallthru
    _
  %v16 = vld [vmem:[%s0] sm:$0xf]
  %v17 = vmul.f32 %v16, 0.5
  %v19 = vrot.slane %v17, 2
  %v21 = vsub.f32 %v16, %v19
  %v22 = vadd.f32 %v16, %v19
  %v24 = vrot.slane %v16, 1
  %v26 = vmul.f32 %v16, %v24
  %v27 = vrcp.pop %v16
  %v28 = vmul.f32 %v16, 0.1
  %v29 = vrcp.pop %v28
  %v30 = vlaneseq
  %v31 = vshrl.u32 %v30, 7
  %v32 = vlaneseq
  %v33 = vand.u32 %v32, 127
  %v34 = vld [vmem:[%s1] sm:$0x7]
  %36 = vrot.lane.b32.xlu0 %v34, 2
  %v37 = vpop.permute.xlu0 %36
  %v39 = vsub.f32 %v34, %v37
  %41 = vrot.lane.b32.xlu0 %v39, 127
  %v42 = vpop.permute.xlu0 %41
  %v44 = vmul.f32 %v39, %v42
  %v45 = vlaneseq
  %v46 = vshrl.u32 %v45, 7
  %v47 = vsub.s32 0, %v46
  %v48 = vrot.slane %v21, %v47
  %49 = vset.pattern.permute.xlu0 0
  %50 = vperm.xlu0 %49, %v34
  %v51 = vpop.permute.xlu0 %50
  %v53 = vmax.f32 %v48, %v51
  %v54 = vlaneseq
  %v55 = vshrl.u32 %v54, 7
  %v56 = vsub.s32 1, %v55
  %v57 = vrot.slane %v21, %v56
  %58 = vset.pattern.permute.xlu0 1
  %59 = vperm.xlu0 %58, %v34
  %v60 = vpop.permute.xlu0 %59
  %v62 = vmax.f32 %v57, %v60
  %v63 = vlaneseq
  %v64 = vshrl.u32 %v63, 7
  %v65 = vsub.s32 0, %v64
  %v66 = vrot.slane %v22, %v65
  %67 = vset.pattern.permute.xlu0 2
  %68 = vperm.xlu0 %67, %v34
  %v69 = vpop.permute.xlu0 %68
  %v71 = vmin.f32 %v66, %v69
  %v72 = vlaneseq
  %v73 = vshrl.u32 %v72, 7
  %v74 = vsub.s32 1, %v73
  %v75 = vrot.slane %v22, %v74
  %76 = vset.pattern.permute.xlu0 3
  %77 = vperm.xlu0 %76, %v34
  %v78 = vpop.permute.xlu0 %77
  %v80 = vmin.f32 %v75, %v78
  %v81 = vsub.f32 %v71, %v53
  %v82 = vmax.f32 %v81, 0.0
  %v83 = vsub.f32 %v80, %v62
  %v84 = vmax.f32 %v83, 0.0
  %v85 = vmul.f32 %v82, %v84
  %v86 = vlaneseq
  %v87 = vshrl.u32 %v86, 7
  %v88 = vsub.s32 2, %v87
  %v89 = vrot.slane %v26, %v88
  %91 = vset.pattern.permute.xlu0 2
  %92 = vperm.xlu0 %91, %v44
  %v93 = vpop.permute.xlu0 %92
  %v95 = vadd.f32 %v89, %v93
  %v96 = vsub.f32 %v95, %v85
  %v97 = vrcp.pop %v96
  %v98 = vmul.f32 %v85, %v97
  %vm99 = vcmask 518144
  %v100 = vsel %vm99, %v98, -inf
  %v101 = vrot.slane %v100, 4
  %v102 = vmax.f32 %v100, %v101
  %v103 = vrot.slane %v102, 2
  %v104 = vmax.f32 %v102, %v103
  %v105 = vrot.slane %v104, 1
  %v106 = vmax.f32 %v104, %v105
  %vm107 = vcmp.eq.f32.partialorder %v98, %v106
  %v108 = vsel %vm107, %v31, 3
  %v109 = vsel %vm99, %v108, 2147483647
  %v110 = vrot.slane %v109, 4
  %vm111 = vcmp.lt.s32.totalorder %v109, %v110
  %v112 = vsel %vm111, %v109, %v110
  %v113 = vrot.slane %v112, 2
  %vm114 = vcmp.lt.s32.totalorder %v112, %v113
  %v115 = vsel %vm114, %v112, %v113
  %v116 = vrot.slane %v115, 1
  %vm117 = vcmp.lt.s32.totalorder %v115, %v116
  %v118 = vsel %vm117, %v115, %v116
  %119 = vmax.xlane.f32.xlu0 %v100
  %v120 = vpop.xlane.xlu0 %119
  %vm121 = vcmp.eq.f32.partialorder %v98, %v120
  %v122 = vsel %vm121, %v33, 64
  %v123 = vsel %vm99, %v122, 2147483647
  %v124 = vand.u32 %v123, 65535
  %v125 = vshra.s32 %v123, 16
  %v126 = vcvt.s32.f32 %v124
  %v127 = vcvt.s32.f32 %v125
  %128 = vmin.xlane.f32.xlu0 %v127
  %v129 = vpop.xlane.xlu0 %128
  %vm130 = vcmp.eq.f32.partialorder %v127, %v129
  %v131 = vsel %vm130, %v126, inf
  %132 = vmin.xlane.f32.xlu0 %v131
  %v133 = vpop.xlane.xlu0 %132
  %v134 = vcvt.f32.s32 %v133
  %v135 = vcvt.f32.s32 %v129
  %v136 = vshll.u32 %v135, 16
  %v137 = vadd.s32 %v136, %v134
  %vm138 = vcmp.eq.s32.totalorder %v137, %v33
  %v139 = vsel %vm138, 1, 0
  %v140 = vsel %vm99, %v139, 2147483648
  %v141 = vrot.slane %v140, 4
  %vm142 = vcmp.gt.s32.totalorder %v140, %v141
  %v143 = vsel %vm142, %v140, %v141
  %v144 = vrot.slane %v143, 2
  %vm145 = vcmp.gt.s32.totalorder %v143, %v144
  %v146 = vsel %vm145, %v143, %v144
  %v147 = vrot.slane %v146, 1
  %vm148 = vcmp.gt.s32.totalorder %v146, %v147
  %v149 = vsel %vm148, %v146, %v147
  %vm150 = vcmp.gt.s32.totalorder %v149, 0
  %v151 = vsel %vm150, 2.0, %v106
  %v152 = vsel %vm138, %v31, 4294967295
  %v153 = vsel %vm99, %v152, 2147483648
  %v154 = vrot.slane %v153, 4
  %vm155 = vcmp.gt.s32.totalorder %v153, %v154
  %v156 = vsel %vm155, %v153, %v154
  %v157 = vrot.slane %v156, 2
  %vm158 = vcmp.gt.s32.totalorder %v156, %v157
  %v159 = vsel %vm158, %v156, %v157
  %v160 = vrot.slane %v159, 1
  %vm161 = vcmp.gt.s32.totalorder %v159, %v160
  %v162 = vsel %vm161, %v159, %v160
  %vm163 = vcmp.ge.s32.totalorder %v162, 0
  %v164 = vsel %vm163, %v162, %v118
  %vm165 = vcmp.eq.s32.totalorder %v164, %v31
  %v166 = vsel %vm165, %v51, 0.0
  %v167 = vsel %vm99, %v166, 0.0
  %v168 = vrot.slane %v167, 4
  %v169 = vadd.f32 %v167, %v168
  %v170 = vrot.slane %v169, 2
  %v171 = vadd.f32 %v169, %v170
  %v172 = vrot.slane %v171, 1
  %v173 = vadd.f32 %v171, %v172
  %v174 = vsel %vm165, %v60, 0.0
  %v175 = vsel %vm99, %v174, 0.0
  %v176 = vrot.slane %v175, 4
  %v177 = vadd.f32 %v175, %v176
  %v178 = vrot.slane %v177, 2
  %v179 = vadd.f32 %v177, %v178
  %v180 = vrot.slane %v179, 1
  %v181 = vadd.f32 %v179, %v180
  %v182 = vsel %vm165, %v69, 0.0
  %v183 = vsel %vm99, %v182, 0.0
  %v184 = vrot.slane %v183, 4
  %v185 = vadd.f32 %v183, %v184
  %v186 = vrot.slane %v185, 2
  %v187 = vadd.f32 %v185, %v186
  %v188 = vrot.slane %v187, 1
  %v189 = vadd.f32 %v187, %v188
  %v190 = vsel %vm165, %v78, 0.0
  %v191 = vsel %vm99, %v190, 0.0
  %v192 = vrot.slane %v191, 4
  %v193 = vadd.f32 %v191, %v192
  %v194 = vrot.slane %v193, 2
  %v195 = vadd.f32 %v193, %v194
  %v196 = vrot.slane %v195, 1
  %v197 = vadd.f32 %v195, %v196
  %198 = vset.pattern.permute.xlu0 4
  %199 = vperm.xlu0 %198, %v34
  %v200 = vpop.permute.xlu0 %199
  %v202 = vsel %vm165, %v200, 0.0
  %v203 = vsel %vm99, %v202, 0.0
  %v204 = vrot.slane %v203, 4
  %v205 = vadd.f32 %v203, %v204
  %v206 = vrot.slane %v205, 2
  %v207 = vadd.f32 %v205, %v206
  %v208 = vrot.slane %v207, 1
  %v209 = vadd.f32 %v207, %v208
  %vm210 = vcmp.lt.f32.partialorder %v151, 0.5
  %v211 = vadd.f32 %v209, 1.0
  %v212 = vsel %vm210, 0.0, %v211
  %v213 = vadd.f32 %v173, %v189
  %v214 = vmul.f32 %v213, 0.5
  %v215 = vsub.f32 %v214, %v16
  %v217 = vrot.slane %v29, 2
  %v219 = vmul.f32 %v215, %v217
  %v220 = vadd.f32 %v181, %v197
  %v221 = vmul.f32 %v220, 0.5
  %v222 = vsub.f32 %v221, %v16
  %v223 = vmul.f32 %v222, %v217
  %v224 = vsub.f32 %v189, %v173
  %v225 = vmul.f32 %v224, %v27
  %v226 = vlog2.pop %v225
  %v227 = vmul.f32 %v226, 0.6931472
  %v228 = vmul.f32 %v227, 5.0
  %v229 = vsub.f32 %v197, %v181
  %v230 = vmul.f32 %v229, %v27
  %v231 = vlog2.pop %v230
  %v232 = vmul.f32 %v231, 0.6931472
  %v233 = vmul.f32 %v232, 5.0
  %v234 = vld [vmem:[%s2] sm:$0xf]
  %v235 = vsub.f32 %v234, %v219
  %v236 = vand.u32 2147483647, %v235
  %vm237 = vcmp.lt.f32.partialorder %v236, 1.0
  %v238 = vmul.f32 %v236, 0.5
  %v239 = vmul.f32 %v238, %v236
  %v240 = vsub.f32 %v236, 0.5
  %v241 = vsel %vm237, %v239, %v240
  %v242 = vsub.f32 %v234, %v223
  %v243 = vand.u32 2147483647, %v242
  %vm244 = vcmp.lt.f32.partialorder %v243, 1.0
  %v245 = vmul.f32 %v243, 0.5
  %v246 = vmul.f32 %v245, %v243
  %v247 = vsub.f32 %v243, 0.5
  %v248 = vsel %vm244, %v246, %v247
  %v250 = vrot.slane %v248, 1
  %v252 = vadd.f32 %v241, %v250
  %v253 = vsub.f32 %v234, %v228
  %v254 = vand.u32 2147483647, %v253
  %vm255 = vcmp.lt.f32.partialorder %v254, 1.0
  %v256 = vmul.f32 %v254, 0.5
  %v257 = vmul.f32 %v256, %v254
  %v258 = vsub.f32 %v254, 0.5
  %v259 = vsel %vm255, %v257, %v258
  %v261 = vrot.slane %v259, 2
  %v263 = vadd.f32 %v252, %v261
  %v264 = vsub.f32 %v234, %v233
  %v265 = vand.u32 2147483647, %v264
  %vm266 = vcmp.lt.f32.partialorder %v265, 1.0
  %v267 = vmul.f32 %v265, 0.5
  %v268 = vmul.f32 %v267, %v265
  %v269 = vsub.f32 %v265, 0.5
  %v270 = vsel %vm266, %v268, %v269
  %v272 = vrot.slane %v270, 3
  %v274 = vadd.f32 %v263, %v272
  %vm275 = vcmp.gt.f32.partialorder %v212, 0.0
  %v276 = vsel %vm275, %v274, 0.0
  %vm277 = vcmask 516096
  %278 = vst.msk [vmem:[%s3] sm:$0x1] %vm277, %v212
  %v279 = vsel %vm277, %v276, 0.0
  %280 = vadd.xlane.f32.xlu0 %v279
  %v281 = vpop.xlane.xlu0 %280
  %v282 = vrot.slane %v281, 4
  %v283 = vadd.f32 %v281, %v282
  %v284 = vrot.slane %v283, 2
  %v285 = vadd.f32 %v283, %v284
  %v286 = vrot.slane %v285, 1
  %v287 = vadd.f32 %v285, %v286
  %s288 = vtos %v287
  %v289 = vstv %s288
  %vm290 = vcmask 0
  %291 = vst.msk [vmem:[%s4] sm:$0x1] %vm290, %v289
  %s292 = scalar_lea.vmem %s1, 4
  %v293 = vld [vmem:[%s292] sm:$0x7]
  %295 = vrot.lane.b32.xlu0 %v293, 2
  %v296 = vpop.permute.xlu0 %295
  %v298 = vsub.f32 %v293, %v296
  %300 = vrot.lane.b32.xlu0 %v298, 127
  %v301 = vpop.permute.xlu0 %300
  %v303 = vmul.f32 %v298, %v301
  %304 = vset.pattern.permute.xlu0 0
  %305 = vperm.xlu0 %304, %v293
  %v306 = vpop.permute.xlu0 %305
  %v308 = vmax.f32 %v48, %v306
  %309 = vset.pattern.permute.xlu0 1
  %310 = vperm.xlu0 %309, %v293
  %v311 = vpop.permute.xlu0 %310
  %v313 = vmax.f32 %v57, %v311
  %314 = vset.pattern.permute.xlu0 2
  %315 = vperm.xlu0 %314, %v293
  %v316 = vpop.permute.xlu0 %315
  %v318 = vmin.f32 %v66, %v316
  %319 = vset.pattern.permute.xlu0 3
  %320 = vperm.xlu0 %319, %v293
  %v321 = vpop.permute.xlu0 %320
  %v323 = vmin.f32 %v75, %v321
  %v324 = vsub.f32 %v318, %v308
  %v325 = vmax.f32 %v324, 0.0
  %v326 = vsub.f32 %v323, %v313
  %v327 = vmax.f32 %v326, 0.0
  %v328 = vmul.f32 %v325, %v327
  %330 = vset.pattern.permute.xlu0 2
  %331 = vperm.xlu0 %330, %v303
  %v332 = vpop.permute.xlu0 %331
  %v334 = vadd.f32 %v89, %v332
  %v335 = vsub.f32 %v334, %v328
  %v336 = vrcp.pop %v335
  %v337 = vmul.f32 %v328, %v336
  %v338 = vsel %vm99, %v337, -inf
  %v339 = vrot.slane %v338, 4
  %v340 = vmax.f32 %v338, %v339
  %v341 = vrot.slane %v340, 2
  %v342 = vmax.f32 %v340, %v341
  %v343 = vrot.slane %v342, 1
  %v344 = vmax.f32 %v342, %v343
  %vm345 = vcmp.eq.f32.partialorder %v337, %v344
  %v346 = vsel %vm345, %v31, 3
  %v347 = vsel %vm99, %v346, 2147483647
  %v348 = vrot.slane %v347, 4
  %vm349 = vcmp.lt.s32.totalorder %v347, %v348
  %v350 = vsel %vm349, %v347, %v348
  %v351 = vrot.slane %v350, 2
  %vm352 = vcmp.lt.s32.totalorder %v350, %v351
  %v353 = vsel %vm352, %v350, %v351
  %v354 = vrot.slane %v353, 1
  %vm355 = vcmp.lt.s32.totalorder %v353, %v354
  %v356 = vsel %vm355, %v353, %v354
  %357 = vmax.xlane.f32.xlu0 %v338
  %v358 = vpop.xlane.xlu0 %357
  %vm359 = vcmp.eq.f32.partialorder %v337, %v358
  %v360 = vsel %vm359, %v33, 64
  %v361 = vsel %vm99, %v360, 2147483647
  %v362 = vand.u32 %v361, 65535
  %v363 = vshra.s32 %v361, 16
  %v364 = vcvt.s32.f32 %v362
  %v365 = vcvt.s32.f32 %v363
  %366 = vmin.xlane.f32.xlu0 %v365
  %v367 = vpop.xlane.xlu0 %366
  %vm368 = vcmp.eq.f32.partialorder %v365, %v367
  %v369 = vsel %vm368, %v364, inf
  %370 = vmin.xlane.f32.xlu0 %v369
  %v371 = vpop.xlane.xlu0 %370
  %v372 = vcvt.f32.s32 %v371
  %v373 = vcvt.f32.s32 %v367
  %v374 = vshll.u32 %v373, 16
  %v375 = vadd.s32 %v374, %v372
  %vm376 = vcmp.eq.s32.totalorder %v375, %v33
  %v377 = vsel %vm376, 1, 0
  %v378 = vsel %vm99, %v377, 2147483648
  %v379 = vrot.slane %v378, 4
  %vm380 = vcmp.gt.s32.totalorder %v378, %v379
  %v381 = vsel %vm380, %v378, %v379
  %v382 = vrot.slane %v381, 2
  %vm383 = vcmp.gt.s32.totalorder %v381, %v382
  %v384 = vsel %vm383, %v381, %v382
  %v385 = vrot.slane %v384, 1
  %vm386 = vcmp.gt.s32.totalorder %v384, %v385
  %v387 = vsel %vm386, %v384, %v385
  %vm388 = vcmp.gt.s32.totalorder %v387, 0
  %v389 = vsel %vm388, 2.0, %v344
  %v390 = vsel %vm376, %v31, 4294967295
  %v391 = vsel %vm99, %v390, 2147483648
  %v392 = vrot.slane %v391, 4
  %vm393 = vcmp.gt.s32.totalorder %v391, %v392
  %v394 = vsel %vm393, %v391, %v392
  %v395 = vrot.slane %v394, 2
  %vm396 = vcmp.gt.s32.totalorder %v394, %v395
  %v397 = vsel %vm396, %v394, %v395
  %v398 = vrot.slane %v397, 1
  %vm399 = vcmp.gt.s32.totalorder %v397, %v398
  %v400 = vsel %vm399, %v397, %v398
  %vm401 = vcmp.ge.s32.totalorder %v400, 0
  %v402 = vsel %vm401, %v400, %v356
  %vm403 = vcmp.eq.s32.totalorder %v402, %v31
  %v404 = vsel %vm403, %v306, 0.0
  %v405 = vsel %vm99, %v404, 0.0
  %v406 = vrot.slane %v405, 4
  %v407 = vadd.f32 %v405, %v406
  %v408 = vrot.slane %v407, 2
  %v409 = vadd.f32 %v407, %v408
  %v410 = vrot.slane %v409, 1
  %v411 = vadd.f32 %v409, %v410
  %v412 = vsel %vm403, %v311, 0.0
  %v413 = vsel %vm99, %v412, 0.0
  %v414 = vrot.slane %v413, 4
  %v415 = vadd.f32 %v413, %v414
  %v416 = vrot.slane %v415, 2
  %v417 = vadd.f32 %v415, %v416
  %v418 = vrot.slane %v417, 1
  %v419 = vadd.f32 %v417, %v418
  %v420 = vsel %vm403, %v316, 0.0
  %v421 = vsel %vm99, %v420, 0.0
  %v422 = vrot.slane %v421, 4
  %v423 = vadd.f32 %v421, %v422
  %v424 = vrot.slane %v423, 2
  %v425 = vadd.f32 %v423, %v424
  %v426 = vrot.slane %v425, 1
  %v427 = vadd.f32 %v425, %v426
  %v428 = vsel %vm403, %v321, 0.0
  %v429 = vsel %vm99, %v428, 0.0
  %v430 = vrot.slane %v429, 4
  %v431 = vadd.f32 %v429, %v430
  %v432 = vrot.slane %v431, 2
  %v433 = vadd.f32 %v431, %v432
  %v434 = vrot.slane %v433, 1
  %v435 = vadd.f32 %v433, %v434
  %436 = vset.pattern.permute.xlu0 4
  %437 = vperm.xlu0 %436, %v293
  %v438 = vpop.permute.xlu0 %437
  %v440 = vsel %vm403, %v438, 0.0
  %v441 = vsel %vm99, %v440, 0.0
  %v442 = vrot.slane %v441, 4
  %v443 = vadd.f32 %v441, %v442
  %v444 = vrot.slane %v443, 2
  %v445 = vadd.f32 %v443, %v444
  %v446 = vrot.slane %v445, 1
  %v447 = vadd.f32 %v445, %v446
  %vm448 = vcmp.lt.f32.partialorder %v389, 0.5
  %v449 = vadd.f32 %v447, 1.0
  %v450 = vsel %vm448, 0.0, %v449
  %v451 = vadd.f32 %v411, %v427
  %v452 = vmul.f32 %v451, 0.5
  %v453 = vsub.f32 %v452, %v16
  %v454 = vmul.f32 %v453, %v217
  %v455 = vadd.f32 %v419, %v435
  %v456 = vmul.f32 %v455, 0.5
  %v457 = vsub.f32 %v456, %v16
  %v458 = vmul.f32 %v457, %v217
  %v459 = vsub.f32 %v427, %v411
  %v460 = vmul.f32 %v459, %v27
  %v461 = vlog2.pop %v460
  %v462 = vmul.f32 %v461, 0.6931472
  %v463 = vmul.f32 %v462, 5.0
  %v464 = vsub.f32 %v435, %v419
  %v465 = vmul.f32 %v464, %v27
  %v466 = vlog2.pop %v465
  %v467 = vmul.f32 %v466, 0.6931472
  %v468 = vmul.f32 %v467, 5.0
  %s469 = scalar_lea.vmem %s2, 4
  %v470 = vld [vmem:[%s469] sm:$0xf]
  %v471 = vsub.f32 %v470, %v454
  %v472 = vand.u32 2147483647, %v471
  %vm473 = vcmp.lt.f32.partialorder %v472, 1.0
  %v474 = vmul.f32 %v472, 0.5
  %v475 = vmul.f32 %v474, %v472
  %v476 = vsub.f32 %v472, 0.5
  %v477 = vsel %vm473, %v475, %v476
  %v478 = vsub.f32 %v470, %v458
  %v479 = vand.u32 2147483647, %v478
  %vm480 = vcmp.lt.f32.partialorder %v479, 1.0
  %v481 = vmul.f32 %v479, 0.5
  %v482 = vmul.f32 %v481, %v479
  %v483 = vsub.f32 %v479, 0.5
  %v484 = vsel %vm480, %v482, %v483
  %v486 = vrot.slane %v484, 1
  %v488 = vadd.f32 %v477, %v486
  %v489 = vsub.f32 %v470, %v463
  %v490 = vand.u32 2147483647, %v489
  %vm491 = vcmp.lt.f32.partialorder %v490, 1.0
  %v492 = vmul.f32 %v490, 0.5
  %v493 = vmul.f32 %v492, %v490
  %v494 = vsub.f32 %v490, 0.5
  %v495 = vsel %vm491, %v493, %v494
  %v497 = vrot.slane %v495, 2
  %v499 = vadd.f32 %v488, %v497
  %v500 = vsub.f32 %v470, %v468
  %v501 = vand.u32 2147483647, %v500
  %vm502 = vcmp.lt.f32.partialorder %v501, 1.0
  %v503 = vmul.f32 %v501, 0.5
  %v504 = vmul.f32 %v503, %v501
  %v505 = vsub.f32 %v501, 0.5
  %v506 = vsel %vm502, %v504, %v505
  %v508 = vrot.slane %v506, 3
  %v510 = vadd.f32 %v499, %v508
  %vm511 = vcmp.gt.f32.partialorder %v450, 0.0
  %v512 = vsel %vm511, %v510, 0.0
  %s513 = scalar_lea.vmem %s3, 1
  %514 = vst.msk [vmem:[%s513] sm:$0x1] %vm277, %v450
  %v515 = vsel %vm277, %v512, 0.0
  %516 = vadd.xlane.f32.xlu0 %v515
  %v517 = vpop.xlane.xlu0 %516
  %v518 = vrot.slane %v517, 4
  %v519 = vadd.f32 %v517, %v518
  %v520 = vrot.slane %v519, 2
  %v521 = vadd.f32 %v519, %v520
  %v522 = vrot.slane %v521, 1
  %v523 = vadd.f32 %v521, %v522
  %s524 = vtos %v523
  %v525 = vstv %s524
  %s526 = scalar_lea.vmem %s4, 1
  %527 = vst.msk [vmem:[%s526] sm:$0x1] %vm290, %v525
  // Predicated region
  $region14: #{multibox_loss.3} parent=0 // pred_check
    _
  $region15: #{multibox_loss.3} parent=0 // pred_check_branch
    %529 = sbr.rel (0) target = $region17
  $region16: #{multibox_loss.3} parent=0 // pred_region
    _
  $region17: #{multibox_loss.3} parent=0 // pred_fallthru
    _
  // Predicated region
  $region18: #{multibox_loss.3} parent=0 // pred_check
    _
  $region19: #{multibox_loss.3} parent=0 // pred_check_branch
    %531 = sbr.rel (0) target = $region21
  $region20: #{multibox_loss.3} parent=0 // pred_region
    _
  $region21: #{multibox_loss.3} parent=0 // pred_fallthru
    _
  // Predicated region
  $region22: #{multibox_loss.3} parent=0 // pred_check
    _
  $region23: #{multibox_loss.3} parent=0 // pred_check_branch
    %533 = sbr.rel (0) target = $region25
  $region24: #{multibox_loss.3} parent=0 // pred_region
    _
  $region25: #{multibox_loss.3} parent=0 // pred_fallthru
    _
  // Predicated region
  $region26: #{multibox_loss.3} parent=0 // pred_check
    _
  $region27: #{multibox_loss.3} parent=0 // pred_check_branch
    %535 = sbr.rel (0) target = $region29
  $region28: #{multibox_loss.3} parent=0 // pred_region
    _
  $region29: #{multibox_loss.3} parent=0 // pred_fallthru
    _

</llo_original>
